<compile_context>
chip_gen: v5e
topology: v5e:2x2
jax: 0.10.0
libtpu: 0.0.40
codegen_flags: <defaults>
</compile_context>

<pallas_src>
import jax
import jax.numpy as jnp
from jax.experimental import pallas as pl
from jax.experimental.pallas import tpu as pltpu

K_IN = 784      # input features
H1 = 128        # hidden1 width
H2 = 64         # hidden2 width (real)
H2_PAD = 128    # hidden2 width padded to a full lane vreg
C_OUT = 10      # real classes
C_PAD = 128     # padded class dim (1 lane vreg -> unmasked stores)
TB = 1024       # max batch tile (multiple of 128)


def _round_up(v, m):
    return ((v + m - 1) // m) * m


def mlp_kernel(x_ref, w1_ref, b1_ref, w2_ref, b2_ref, w3_ref, b3_ref, o_ref):
    # Cast activations to bf16 in-kernel (VPU work, hidden under the DMA).
    x = x_ref[...].astype(jnp.bfloat16)                       # (TB, 784)

    # Layer 1: (TB,784)bf16 @ (784,128)bf16 -> f32 acc, +bias, ReLU.
    h1 = jnp.dot(x, w1_ref[...], preferred_element_type=jnp.float32)
    h1 = jnp.maximum(h1 + b1_ref[...], 0.0).astype(jnp.bfloat16)

    # Layer 2: (TB,128)bf16 @ (128,128)bf16 -> f32 acc, +bias, ReLU.
    # Padded W2 cols / b2 entries are zero, so padded h2 cols are exactly 0.
    h2 = jnp.dot(h1, w2_ref[...], preferred_element_type=jnp.float32)
    h2 = jnp.maximum(h2 + b2_ref[...], 0.0).astype(jnp.bfloat16)

    # Output layer: (TB,128)bf16 @ (128,128)bf16 -> f32.  Padded W3 rows are
    # zero; padded class cols carry bias -1e30 so they vanish under softmax.
    logits = jnp.dot(h2, w3_ref[...], preferred_element_type=jnp.float32)
    logits = logits + b3_ref[...]

    # Numerically-stable softmax over the (padded) class axis, all in f32.
    # Exact divide so rows sum to 1 (matches PyTorch's normalization).
    m = jnp.max(logits, axis=-1, keepdims=True)
    e = jnp.exp(logits - m)
    denom = jnp.sum(e, axis=-1, keepdims=True)
    o_ref[...] = (e / denom).astype(o_ref.dtype)


def mlp_forward(x, w1, b1, w2, b2, w3, b3, *, tb_max=TB):
    B, K = x.shape
    assert K == K_IN

    # Pick a batch tile that (a) is a multiple of 128, (b) is capped at tb_max,
    # and (c) yields at least 2 grid steps so both v7x TensorCores get work.
    tb = min(tb_max, max(128, _round_up(pl.cdiv(B, 2), 128)))
    B_pad = max(_round_up(B, tb), 2 * tb)
    nb = B_pad // tb

    # Only pad the batch dim (no feature padding, no dtype-cast copy of x).
    if B_pad != B:
        x = jnp.pad(x, ((0, B_pad - B), (0, 0)))

    # --- one-time (tiny) weight/bias prep to lane-dense shapes ---------------
    w1_b = w1.astype(jnp.bfloat16)                                       # (784,128)
    w2_p = jnp.zeros((H1, H2_PAD), jnp.bfloat16).at[:, :H2].set(
        w2.astype(jnp.bfloat16))                                         # (128,128)
    w3_p = jnp.zeros((H2_PAD, C_PAD), jnp.bfloat16).at[:H2, :C_OUT].set(
        w3.astype(jnp.bfloat16))                                         # (128,128)
    b1_f = b1.reshape(1, H1).astype(jnp.float32)
    b2_p = jnp.zeros((1, H2_PAD), jnp.float32).at[:, :H2].set(
        b2.reshape(1, H2).astype(jnp.float32))
    b3_p = jnp.full((1, C_PAD), -1e30, jnp.float32).at[:, :C_OUT].set(
        b3.reshape(1, C_OUT).astype(jnp.float32))

    resident = lambda shape: pl.BlockSpec(shape, lambda i: (0, 0))

    cost = pl.CostEstimate(
        flops=2 * B_pad * (K_IN * H1 + H1 * H2 + H2 * C_OUT),
        transcendentals=B_pad * C_PAD,
        bytes_accessed=B_pad * (K_IN * 4 + C_PAD * 2)
        + 2 * (K_IN * H1 + H1 * H2_PAD + H2_PAD * C_PAD),
    )

    out = pl.pallas_call(
        mlp_kernel,
        out_shape=jax.ShapeDtypeStruct((B_pad, C_PAD), jnp.bfloat16),
        grid=(nb,),
        in_specs=[
            pl.BlockSpec((tb, K_IN), lambda i: (i, 0)),   # x: tiled over batch
            resident(w1_b.shape), resident(b1_f.shape),   # weights/biases VMEM-resident
            resident(w2_p.shape), resident(b2_p.shape),
            resident(w3_p.shape), resident(b3_p.shape),
        ],
        out_specs=pl.BlockSpec((tb, C_PAD), lambda i: (i, 0)),
        compiler_params=pltpu.CompilerParams(
            dimension_semantics=("parallel",),
        ),
        cost_estimate=cost,
    )(x, w1_b, b1_f, w2_p, b2_p, w3_p, b3_p)

    return out[:B, :C_OUT]


def init_params(key):
    """Deterministic init mimicking PyTorch Linear's U(-1/sqrt(fan_in), 1/sqrt(fan_in))."""
    def linear(k, fan_in, fan_out):
        kw, kb = jax.random.split(k)
        bound = 1.0 / jnp.sqrt(fan_in)
        w = jax.random.uniform(kw, (fan_in, fan_out), jnp.float32, -bound, bound)
        b = jax.random.uniform(kb, (1, fan_out), jnp.float32, -bound, bound)
        return w, b

    k1, k2, k3 = jax.random.split(key, 3)
    w1, b1 = linear(k1, 784, 128)
    w2, b2 = linear(k2, 128, 64)
    w3, b3 = linear(k3, 64, 10)
    return w1, b1, w2, b2, w3, b3


if __name__ == "__main__":
    key = jax.random.PRNGKey(0)
    kx, kp = jax.random.split(key)

    B = 8  # small batch of flattened 28x28 images
    x = jax.random.normal(kx, (B, 784), jnp.float32)
    params = init_params(kp)

    out = mlp_forward(x, *params)
    out = jax.block_until_ready(out)
    assert out.shape == (B, 10)

    out_f32 = out.astype(jnp.float32)

    # Softmax rows sum to 1 (bf16 output quantization -> small tolerance).
    assert jnp.allclose(jnp.sum(out_f32, axis=1), 1.0, atol=1e-2)

    # Cross-check against a plain-JAX f32 reference of the same math
    # (bf16 matmul operands + bf16 output -> modest tolerance).
    w1, b1, w2, b2, w3, b3 = params
    h1 = jnp.maximum(x @ w1 + b1, 0.0)
    h2 = jnp.maximum(h1 @ w2 + b2, 0.0)
    ref = jax.nn.softmax(h2 @ w3 + b3, axis=1)
    assert jnp.allclose(out_f32, ref, atol=3e-2, rtol=0.0)

    print("KERNEL_OK")
</pallas_src>

<mosaic_0001>
module attributes {stable_mosaic.version = 11 : i64} {
  func.func @mlp_kernel(%arg0: i32, %arg1: memref<128x784xf32, #tpu.memory_space<vmem>>, %arg2: memref<784x128xbf16, #tpu.memory_space<vmem>>, %arg3: memref<1x128xf32, #tpu.memory_space<vmem>>, %arg4: memref<128x128xbf16, #tpu.memory_space<vmem>>, %arg5: memref<1x128xf32, #tpu.memory_space<vmem>>, %arg6: memref<128x128xbf16, #tpu.memory_space<vmem>>, %arg7: memref<1x128xf32, #tpu.memory_space<vmem>>, %arg8: memref<128x128xbf16, #tpu.memory_space<vmem>>) attributes {dimension_semantics = [#tpu.dimension_semantics<parallel>], iteration_bounds = array<i64: 2>, scalar_prefetch = 0 : i64, scratch_operands = 0 : i64, tpu.core_type = #tpu.core_type<tc>, window_params = [{transform_indices = @transform_0, window_bounds = array<i64: 128, 784>}, {pipeline_mode = #tpu.pipeline_mode<synchronous>, transform_indices = @transform_1, window_bounds = array<i64: 784, 128>}, {pipeline_mode = #tpu.pipeline_mode<synchronous>, transform_indices = @transform_2, window_bounds = array<i64: 1, 128>}, {pipeline_mode = #tpu.pipeline_mode<synchronous>, transform_indices = @transform_3, window_bounds = array<i64: 128, 128>}, {pipeline_mode = #tpu.pipeline_mode<synchronous>, transform_indices = @transform_4, window_bounds = array<i64: 1, 128>}, {pipeline_mode = #tpu.pipeline_mode<synchronous>, transform_indices = @transform_5, window_bounds = array<i64: 128, 128>}, {pipeline_mode = #tpu.pipeline_mode<synchronous>, transform_indices = @transform_6, window_bounds = array<i64: 1, 128>}, {transform_indices = @transform_7, window_bounds = array<i64: 128, 128>}]} {
    %c0 = arith.constant 0 : index
    %c0_0 = arith.constant 0 : index
    %0 = vector.load %arg1[%c0, %c0_0] : memref<128x784xf32, #tpu.memory_space<vmem>>, vector<128x784xf32>
    %1 = arith.truncf %0 : vector<128x784xf32> to vector<128x784xbf16>
    %c0_1 = arith.constant 0 : index
    %c0_2 = arith.constant 0 : index
    %2 = vector.load %arg2[%c0_1, %c0_2] : memref<784x128xbf16, #tpu.memory_space<vmem>>, vector<784x128xbf16>
    %cst = arith.constant dense<0.000000e+00> : vector<128x128xf32>
    %3 = tpu.matmul %1, %2, %cst {dimension_numbers = #tpu.dot_dimension_numbers<[1], [0], [0], [1], [0, 0, 1, 1], [], []>} : vector<128x784xbf16>, vector<784x128xbf16>, vector<128x128xf32> -> vector<128x128xf32>
    %c0_3 = arith.constant 0 : index
    %c0_4 = arith.constant 0 : index
    %4 = vector.load %arg3[%c0_3, %c0_4] : memref<1x128xf32, #tpu.memory_space<vmem>>, vector<1x128xf32>
    %5 = vector.broadcast %4 : vector<1x128xf32> to vector<128x128xf32>
    %6 = arith.addf %3, %5 : vector<128x128xf32>
    %cst_5 = arith.constant 0.000000e+00 : f32
    %7 = vector.broadcast %cst_5 : f32 to vector<128x128xf32>
    %8 = arith.maximumf %6, %7 : vector<128x128xf32>
    %9 = arith.truncf %8 : vector<128x128xf32> to vector<128x128xbf16>
    %c0_6 = arith.constant 0 : index
    %c0_7 = arith.constant 0 : index
    %10 = vector.load %arg4[%c0_6, %c0_7] : memref<128x128xbf16, #tpu.memory_space<vmem>>, vector<128x128xbf16>
    %cst_8 = arith.constant dense<0.000000e+00> : vector<128x128xf32>
    %11 = tpu.matmul %9, %10, %cst_8 {dimension_numbers = #tpu.dot_dimension_numbers<[1], [0], [0], [1], [0, 0, 1, 1], [], []>} : vector<128x128xbf16>, vector<128x128xbf16>, vector<128x128xf32> -> vector<128x128xf32>
    %c0_9 = arith.constant 0 : index
    %c0_10 = arith.constant 0 : index
    %12 = vector.load %arg5[%c0_9, %c0_10] : memref<1x128xf32, #tpu.memory_space<vmem>>, vector<1x128xf32>
    %13 = vector.broadcast %12 : vector<1x128xf32> to vector<128x128xf32>
    %14 = arith.addf %11, %13 : vector<128x128xf32>
    %cst_11 = arith.constant 0.000000e+00 : f32
    %15 = vector.broadcast %cst_11 : f32 to vector<128x128xf32>
    %16 = arith.maximumf %14, %15 : vector<128x128xf32>
    %17 = arith.truncf %16 : vector<128x128xf32> to vector<128x128xbf16>
    %c0_12 = arith.constant 0 : index
    %c0_13 = arith.constant 0 : index
    %18 = vector.load %arg6[%c0_12, %c0_13] : memref<128x128xbf16, #tpu.memory_space<vmem>>, vector<128x128xbf16>
    %cst_14 = arith.constant dense<0.000000e+00> : vector<128x128xf32>
    %19 = tpu.matmul %17, %18, %cst_14 {dimension_numbers = #tpu.dot_dimension_numbers<[1], [0], [0], [1], [0, 0, 1, 1], [], []>} : vector<128x128xbf16>, vector<128x128xbf16>, vector<128x128xf32> -> vector<128x128xf32>
    %c0_15 = arith.constant 0 : index
    %c0_16 = arith.constant 0 : index
    %20 = vector.load %arg7[%c0_15, %c0_16] : memref<1x128xf32, #tpu.memory_space<vmem>>, vector<1x128xf32>
    %21 = vector.broadcast %20 : vector<1x128xf32> to vector<128x128xf32>
    %22 = arith.addf %19, %21 : vector<128x128xf32>
    %cst_17 = arith.constant dense<0xFF800000> : vector<128xf32>
    %23 = vector.multi_reduction <maximumf>, %22, %cst_17 [1] : vector<128x128xf32> to vector<128xf32>
    %24 = vector.shape_cast %23 : vector<128xf32> to vector<128x1xf32>
    %25 = vector.broadcast %24 : vector<128x1xf32> to vector<128x128xf32>
    %26 = arith.subf %22, %25 : vector<128x128xf32>
    %27 = math.exp %26 : vector<128x128xf32>
    %cst_18 = arith.constant dense<0.000000e+00> : vector<128xf32>
    %28 = vector.multi_reduction <add>, %27, %cst_18 [1] : vector<128x128xf32> to vector<128xf32>
    %29 = vector.shape_cast %28 : vector<128xf32> to vector<128x1xf32>
    %30 = vector.broadcast %29 : vector<128x1xf32> to vector<128x128xf32>
    %31 = arith.divf %27, %30 : vector<128x128xf32>
    %32 = arith.truncf %31 : vector<128x128xf32> to vector<128x128xbf16>
    %c0_19 = arith.constant 0 : index
    %c0_20 = arith.constant 0 : index
    %33 = vector.load %arg8[%c0_19, %c0_20] : memref<128x128xbf16, #tpu.memory_space<vmem>>, vector<128x128xbf16>
    tpu.vector_store %arg8[%c0_19, %c0_20], %32 {strides = array<i32>} : memref<128x128xbf16, #tpu.memory_space<vmem>>, vector<128x128xbf16>,
    return
  }
  func.func @transform_0(%arg0: i32) -> (i32, i32) {
    %c0_i32 = arith.constant 0 : i32
    %c0_i32_0 = arith.constant 0 : i32
    return %arg0, %c0_i32 : i32, i32
  }
  func.func @transform_1(%arg0: i32) -> (i32, i32) {
    %c0_i32 = arith.constant 0 : i32
    %c0_i32_0 = arith.constant 0 : i32
    %c0_i32_1 = arith.constant 0 : i32
    return %c0_i32, %c0_i32_0 : i32, i32
  }
  func.func @transform_2(%arg0: i32) -> (i32, i32) {
    %c0_i32 = arith.constant 0 : i32
    %c0_i32_0 = arith.constant 0 : i32
    %c0_i32_1 = arith.constant 0 : i32
    return %c0_i32, %c0_i32_0 : i32, i32
  }
  func.func @transform_3(%arg0: i32) -> (i32, i32) {
    %c0_i32 = arith.constant 0 : i32
    %c0_i32_0 = arith.constant 0 : i32
    %c0_i32_1 = arith.constant 0 : i32
    return %c0_i32, %c0_i32_0 : i32, i32
  }
  func.func @transform_4(%arg0: i32) -> (i32, i32) {
    %c0_i32 = arith.constant 0 : i32
    %c0_i32_0 = arith.constant 0 : i32
    %c0_i32_1 = arith.constant 0 : i32
    return %c0_i32, %c0_i32_0 : i32, i32
  }
  func.func @transform_5(%arg0: i32) -> (i32, i32) {
    %c0_i32 = arith.constant 0 : i32
    %c0_i32_0 = arith.constant 0 : i32
    %c0_i32_1 = arith.constant 0 : i32
    return %c0_i32, %c0_i32_0 : i32, i32
  }
  func.func @transform_6(%arg0: i32) -> (i32, i32) {
    %c0_i32 = arith.constant 0 : i32
    %c0_i32_0 = arith.constant 0 : i32
    %c0_i32_1 = arith.constant 0 : i32
    return %c0_i32, %c0_i32_0 : i32, i32
  }
  func.func @transform_7(%arg0: i32) -> (i32, i32) {
    %c0_i32 = arith.constant 0 : i32
    %c0_i32_0 = arith.constant 0 : i32
    return %arg0, %c0_i32 : i32, i32
  }
}

</mosaic_0001>

<llo_original>
// kernel: tpu_custom_call.1
$region0: #{tpu_custom_call.1}
  #allocation0 [shape = 'u32[]', space=smem, size = 0x4, offset = 0x4, fixed_abs, tag = 'smem constant byte address 0x4 - core index']
  #allocation1 [shape = 'u32[72,128]{1,0:T(1,128)}', space=vmem, size = 0x9000, scoped, tag = 'internal scratch']
  %s0 = inlined_call_operand.vmem [shape: f32[256,784], index: 0, kind: input, shape index: {}]
  %s1 = inlined_call_operand.vmem [shape: bf16[784,128], index: 1, kind: input, shape index: {}]
  %s2 = inlined_call_operand.vmem [shape: f32[1,128], index: 2, kind: input, shape index: {}]
  %s3 = inlined_call_operand.vmem [shape: bf16[128,128], index: 3, kind: input, shape index: {}]
  %s4 = inlined_call_operand.vmem [shape: f32[1,128], index: 4, kind: input, shape index: {}]
  %s5 = inlined_call_operand.vmem [shape: bf16[128,128], index: 5, kind: input, shape index: {}]
  %s6 = inlined_call_operand.vmem [shape: f32[1,128], index: 6, kind: input, shape index: {}]
  %s7 = inlined_call_operand.hbm [shape: bf16[256,128], index: 7, kind: output, shape index: {}]
  %s8 = sld [smem:[#allocation0]]
  $region61: #{tpu_custom_call.1} parent=0
    _
  %s10 = ssub.s32 1, %s8
  %s11 = scalar_select 0, %s10, %s8
  $region1: #{tpu_custom_call.1} parent=0
    #allocation2 [shape = 'u8[65536]{0}', space=vmem, size = 0x10000, scoped, tag = 'output window, operand 0']
    #allocation3 [shape = 's32[2]{0}', space=sflag, size = 0x8, scoped, tag = 'scoped memory for tpu_custom_call.1']
    %12 = vsyncpa [#allocation3], 0
    %s13 = scalar_lea.sflag [#allocation3], 1
    %14 = vsyncpa %s13, 0
    loop: start=0, step=1, limit=4
    $region2: #{tpu_custom_call.1} parent=1 // loop_pre_header
      _
    $region3: #{tpu_custom_call.1} parent=1 // loop_header
      %s16 = sphi 0, %s20
      %p17 = scmp.ge.s32.totalorder %s16, 4
      %s26 = sphi 0, %s28
      %s29 = sphi 0, %s26
      %s30 = sphi 0, %s29
      %s46 = sphi 0, %s30
      %s50 = sphi 0, %s50
      %s52 = sphi 0, %s50
      %s53 = sphi 0, %s52
      %s67 = sphi 0, %s53
      %s71 = sphi 0, %s71
      %s73 = sphi 0, %s71
      %s74 = sphi 0, %s73
      %s88 = sphi 0, %s74
      %s92 = sphi 0, %s92
      %s94 = sphi 0, %s92
      %s95 = sphi 0, %s94
      %s109 = sphi 0, %s95
      %s113 = sphi 0, %s113
      %s115 = sphi 0, %s113
      %s116 = sphi 0, %s115
      %s130 = sphi 0, %s116
      %s134 = sphi 0, %s134
      %s136 = sphi 0, %s134
      %s137 = sphi 0, %s136
      %s151 = sphi 0, %s137
      %s155 = sphi 0, %s155
      %s157 = sphi 0, %s155
      %s158 = sphi 0, %s157
      %s172 = sphi 0, %s158
      %s178 = sphi 0, %s180
      %s181 = sphi 0, %s178
      %s182 = sphi 0, %s181
      %s198 = sphi 0, %s182
    $region4: #{tpu_custom_call.1} parent=1 // loop_header_branch
      %19 = sbr.rel (%p17) target = $region8
    $region5: #{tpu_custom_call.1} parent=1 // loop_body
      %s21 = ssub.s32 %s16, 1
      %s22 = ssub.s32 %s16, 2
      %s23 = sadd.s32 %s16, 1
      %s24 = ssub.s32 %s16, %s23
      %p25 = scmp.eq.s32.totalorder %s24, 0
      %s27 = sadd.s32 %s26, 1
      %s28 = scalar_select %p25, %s26, %s27
      %p31 = pneg %p25
      %p32 = scmp.eq.s32.totalorder %s16, 1
      %p33 = por %p31, %p32
      %p34 = scmp.ne.s32.totalorder %s26, %s29
      %p35 = scmp.eq.s32.totalorder %s16, 0
      %p36 = por %p34, %p35
      %p37 = scmp.ne.s32.totalorder %s26, %s29
      %p38 = scmp.eq.s32.totalorder %s21, 1
      %p39 = por %p37, %p38
      %p40 = scmp.ne.s32.totalorder %s29, %s30
      %p41 = scmp.eq.s32.totalorder %s21, 0
      %p42 = por %p40, %p41
      %p43 = scmp.ne.s32.totalorder %s29, %s30
      %p44 = scmp.eq.s32.totalorder %s22, 1
      %p45 = por %p43, %p44
      %p47 = scmp.ne.s32.totalorder %s30, %s46
      %p48 = scmp.eq.s32.totalorder %s22, 0
      %p49 = por %p47, %p48
      %s51 = sadd.s32 %s50, 1
      %p54 = scmp.eq.s32.totalorder %s16, 1
      %p55 = scmp.ne.s32.totalorder %s50, %s52
      %p56 = scmp.eq.s32.totalorder %s16, 0
      %p57 = por %p55, %p56
      %p58 = scmp.ne.s32.totalorder %s50, %s52
      %p59 = scmp.eq.s32.totalorder %s21, 1
      %p60 = por %p58, %p59
      %p61 = scmp.ne.s32.totalorder %s52, %s53
      %p62 = scmp.eq.s32.totalorder %s21, 0
      %p63 = por %p61, %p62
      %p64 = scmp.ne.s32.totalorder %s52, %s53
      %p65 = scmp.eq.s32.totalorder %s22, 1
      %p66 = por %p64, %p65
      %p68 = scmp.ne.s32.totalorder %s53, %s67
      %p69 = scmp.eq.s32.totalorder %s22, 0
      %p70 = por %p68, %p69
      %s72 = sadd.s32 %s71, 1
      %p75 = scmp.eq.s32.totalorder %s16, 1
      %p76 = scmp.ne.s32.totalorder %s71, %s73
      %p77 = scmp.eq.s32.totalorder %s16, 0
      %p78 = por %p76, %p77
      %p79 = scmp.ne.s32.totalorder %s71, %s73
      %p80 = scmp.eq.s32.totalorder %s21, 1
      %p81 = por %p79, %p80
      %p82 = scmp.ne.s32.totalorder %s73, %s74
      %p83 = scmp.eq.s32.totalorder %s21, 0
      %p84 = por %p82, %p83
      %p85 = scmp.ne.s32.totalorder %s73, %s74
      %p86 = scmp.eq.s32.totalorder %s22, 1
      %p87 = por %p85, %p86
      %p89 = scmp.ne.s32.totalorder %s74, %s88
      %p90 = scmp.eq.s32.totalorder %s22, 0
      %p91 = por %p89, %p90
      %s93 = sadd.s32 %s92, 1
      %p96 = scmp.eq.s32.totalorder %s16, 1
      %p97 = scmp.ne.s32.totalorder %s92, %s94
      %p98 = scmp.eq.s32.totalorder %s16, 0
      %p99 = por %p97, %p98
      %p100 = scmp.ne.s32.totalorder %s92, %s94
      %p101 = scmp.eq.s32.totalorder %s21, 1
      %p102 = por %p100, %p101
      %p103 = scmp.ne.s32.totalorder %s94, %s95
      %p104 = scmp.eq.s32.totalorder %s21, 0
      %p105 = por %p103, %p104
      %p106 = scmp.ne.s32.totalorder %s94, %s95
      %p107 = scmp.eq.s32.totalorder %s22, 1
      %p108 = por %p106, %p107
      %p110 = scmp.ne.s32.totalorder %s95, %s109
      %p111 = scmp.eq.s32.totalorder %s22, 0
      %p112 = por %p110, %p111
      %s114 = sadd.s32 %s113, 1
      %p117 = scmp.eq.s32.totalorder %s16, 1
      %p118 = scmp.ne.s32.totalorder %s113, %s115
      %p119 = scmp.eq.s32.totalorder %s16, 0
      %p120 = por %p118, %p119
      %p121 = scmp.ne.s32.totalorder %s113, %s115
      %p122 = scmp.eq.s32.totalorder %s21, 1
      %p123 = por %p121, %p122
      %p124 = scmp.ne.s32.totalorder %s115, %s116
      %p125 = scmp.eq.s32.totalorder %s21, 0
      %p126 = por %p124, %p125
      %p127 = scmp.ne.s32.totalorder %s115, %s116
      %p128 = scmp.eq.s32.totalorder %s22, 1
      %p129 = por %p127, %p128
      %p131 = scmp.ne.s32.totalorder %s116, %s130
      %p132 = scmp.eq.s32.totalorder %s22, 0
      %p133 = por %p131, %p132
      %s135 = sadd.s32 %s134, 1
      %p138 = scmp.eq.s32.totalorder %s16, 1
      %p139 = scmp.ne.s32.totalorder %s134, %s136
      %p140 = scmp.eq.s32.totalorder %s16, 0
      %p141 = por %p139, %p140
      %p142 = scmp.ne.s32.totalorder %s134, %s136
      %p143 = scmp.eq.s32.totalorder %s21, 1
      %p144 = por %p142, %p143
      %p145 = scmp.ne.s32.totalorder %s136, %s137
      %p146 = scmp.eq.s32.totalorder %s21, 0
      %p147 = por %p145, %p146
      %p148 = scmp.ne.s32.totalorder %s136, %s137
      %p149 = scmp.eq.s32.totalorder %s22, 1
      %p150 = por %p148, %p149
      %p152 = scmp.ne.s32.totalorder %s137, %s151
      %p153 = scmp.eq.s32.totalorder %s22, 0
      %p154 = por %p152, %p153
      %s156 = sadd.s32 %s155, 1
      %p159 = scmp.eq.s32.totalorder %s16, 1
      %p160 = scmp.ne.s32.totalorder %s155, %s157
      %p161 = scmp.eq.s32.totalorder %s16, 0
      %p162 = por %p160, %p161
      %p163 = scmp.ne.s32.totalorder %s155, %s157
      %p164 = scmp.eq.s32.totalorder %s21, 1
      %p165 = por %p163, %p164
      %p166 = scmp.ne.s32.totalorder %s157, %s158
      %p167 = scmp.eq.s32.totalorder %s21, 0
      %p168 = por %p166, %p167
      %p169 = scmp.ne.s32.totalorder %s157, %s158
      %p170 = scmp.eq.s32.totalorder %s22, 1
      %p171 = por %p169, %p170
      %p173 = scmp.ne.s32.totalorder %s158, %s172
      %p174 = scmp.eq.s32.totalorder %s22, 0
      %p175 = por %p173, %p174
      %s176 = ssub.s32 %s16, %s23
      %p177 = scmp.eq.s32.totalorder %s176, 0
      %s179 = sadd.s32 %s178, 1
      %s180 = scalar_select %p177, %s178, %s179
      %p183 = pneg %p177
      %p184 = scmp.eq.s32.totalorder %s16, 1
      %p185 = por %p183, %p184
      %p186 = scmp.ne.s32.totalorder %s178, %s181
      %p187 = scmp.eq.s32.totalorder %s16, 0
      %p188 = por %p186, %p187
      %p189 = scmp.ne.s32.totalorder %s178, %s181
      %p190 = scmp.eq.s32.totalorder %s21, 1
      %p191 = por %p189, %p190
      %p192 = scmp.ne.s32.totalorder %s181, %s182
      %p193 = scmp.eq.s32.totalorder %s21, 0
      %p194 = por %p192, %p193
      %p195 = scmp.ne.s32.totalorder %s181, %s182
      %p196 = scmp.eq.s32.totalorder %s22, 1
      %p197 = por %p195, %p196
      %p199 = scmp.ne.s32.totalorder %s182, %s198
      %p200 = scmp.eq.s32.totalorder %s22, 0
      %p201 = por %p199, %p200
      %p202 = scmp.le.s32.totalorder 1, %s16
      %p203 = scmp.lt.s32.totalorder %s16, 3
      %p204 = pnand %p202, %p203
      %p205 = pneg %p204
      // Predicated region
      $region9: #{tpu_custom_call.1} parent=5 // pred_check
        _
      $region10: #{tpu_custom_call.1} parent=5 // pred_check_branch
        %207 = sbr.rel (%p204) target = $region12
      $region11: #{tpu_custom_call.1} parent=5 // pred_region
        %s208 = ssub.s32 %s16, 1
        // Predicated region
        $region13: #{tpu_custom_call.1} parent=11 // pred_check
          %p209 = pneg %p63
        $region14: #{tpu_custom_call.1} parent=11 // pred_check_branch
          %211 = sbr.rel (%p209) target = $region16
        $region15: #{tpu_custom_call.1} parent=11 // pred_region
          _
        $region16: #{tpu_custom_call.1} parent=11 // pred_fallthru
          _
        // Predicated region
        $region17: #{tpu_custom_call.1} parent=11 // pred_check
          %p212 = pneg %p84
        $region18: #{tpu_custom_call.1} parent=11 // pred_check_branch
          %214 = sbr.rel (%p212) target = $region20
        $region19: #{tpu_custom_call.1} parent=11 // pred_region
          _
        $region20: #{tpu_custom_call.1} parent=11 // pred_fallthru
          _
        // Predicated region
        $region21: #{tpu_custom_call.1} parent=11 // pred_check
          %p215 = pneg %p105
        $region22: #{tpu_custom_call.1} parent=11 // pred_check_branch
          %217 = sbr.rel (%p215) target = $region24
        $region23: #{tpu_custom_call.1} parent=11 // pred_region
          _
        $region24: #{tpu_custom_call.1} parent=11 // pred_fallthru
          _
        // Predicated region
        $region25: #{tpu_custom_call.1} parent=11 // pred_check
          %p218 = pneg %p126
        $region26: #{tpu_custom_call.1} parent=11 // pred_check_branch
          %220 = sbr.rel (%p218) target = $region28
        $region27: #{tpu_custom_call.1} parent=11 // pred_region
          _
        $region28: #{tpu_custom_call.1} parent=11 // pred_fallthru
          _
        // Predicated region
        $region29: #{tpu_custom_call.1} parent=11 // pred_check
          %p221 = pneg %p147
        $region30: #{tpu_custom_call.1} parent=11 // pred_check_branch
          %223 = sbr.rel (%p221) target = $region32
        $region31: #{tpu_custom_call.1} parent=11 // pred_region
          _
        $region32: #{tpu_custom_call.1} parent=11 // pred_fallthru
          _
        // Predicated region
        $region33: #{tpu_custom_call.1} parent=11 // pred_check
          %p224 = pneg %p168
        $region34: #{tpu_custom_call.1} parent=11 // pred_check_branch
          %226 = sbr.rel (%p224) target = $region36
        $region35: #{tpu_custom_call.1} parent=11 // pred_region
          _
        $region36: #{tpu_custom_call.1} parent=11 // pred_fallthru
          _
      $region12: #{tpu_custom_call.1} parent=5 // pred_fallthru
        _
      %p227 = scmp.lt.s32.totalorder %s16, 2
      // Predicated region
      $region37: #{tpu_custom_call.1} parent=5 // pred_check
        %p228 = pneg %p227
      $region38: #{tpu_custom_call.1} parent=5 // pred_check_branch
        %230 = sbr.rel (%p228) target = $region40
      $region39: #{tpu_custom_call.1} parent=5 // pred_region
        // Predicated region
        $region41: #{tpu_custom_call.1} parent=39 // pred_check
          %p231 = pneg %p36
        $region42: #{tpu_custom_call.1} parent=39 // pred_check_branch
          %233 = sbr.rel (%p231) target = $region44
        $region43: #{tpu_custom_call.1} parent=39 // pred_region
          %s234 = smul.u32 16, %s16
          %p235 = scmp.lt.s32.totalorder %s234, 31
          %s236 = scalar_select %p235, %s234, 31
          %s237 = smul.addr %s236, 7
          %s238 = smul.addr %s237, 8
          %s239 = scalar_lea.vmem %s0, %s238
          %s240 = smul.u32 16, %s16
        $region44: #{tpu_custom_call.1} parent=39 // pred_fallthru
          _
      $region40: #{tpu_custom_call.1} parent=5 // pred_fallthru
        _
      %p241 = scmp.le.s32.totalorder 1, %s16
      %p242 = scmp.lt.s32.totalorder %s16, 3
      %p243 = pnand %p241, %p242
      %p244 = pneg %p243
      // Predicated region
      $region45: #{tpu_custom_call.1} parent=5 // pred_check
        _
      $region46: #{tpu_custom_call.1} parent=5 // pred_check_branch
        %246 = sbr.rel (%p243) target = $region48
      $region47: #{tpu_custom_call.1} parent=5 // pred_region
        %s247 = ssub.s32 %s16, 1
        %s248 = smul.u32 16, %s21
        %p249 = scmp.lt.s32.totalorder %s248, 31
        %s250 = scalar_select %p249, %s248, 31
        %s251 = smul.addr %s250, 7
        %s252 = smul.addr %s251, 8
        %s253 = scalar_lea.vmem %s0, %s252
        %p254 = pneg %p42
        %p255 = pneg %p39
        %p256 = pneg %p63
        %p257 = pneg %p60
        %p258 = pneg %p84
        %p259 = pneg %p81
        %p260 = pneg %p105
        %p261 = pneg %p102
        %p262 = pneg %p126
        %p263 = pneg %p123
        %p264 = pneg %p147
        %p265 = pneg %p144
        %p266 = pneg %p168
        %p267 = pneg %p165
        %p268 = pneg %p194
        %p269 = pneg %p191
        %s270 = sand.u32 %s181, 1
        %s271 = scalar_lea.sflag [#allocation3], %s270
        %s272 = sand.u32 %s181, 1
        %s273 = smul.addr %s272, 64
        %s274 = scalar_lea.vmem [#allocation2], %s273
        %s275 = smul.u32 16, %s21
        %p276 = scmp.lt.s32.totalorder %s275, 31
        %s277 = scalar_select %p276, %s275, 31
        %s278 = smul.addr %s277, 7
        %s279 = smul.addr %s278, 8
        %s280 = scalar_lea.vmem %s0, %s279
        %s281 = smul.u32 16, %s21
        %s282 = smul.u32 16, %s21
        %v284 = vld [vmem:[%s280] sm:$0xff]
        %v285 = vld [vmem:[%s280 + $0x8] sm:$0xff]
        %v286 = vld [vmem:[%s280 + $0x10] sm:$0xff]
        %v287 = vld [vmem:[%s280 + $0x18] sm:$0xff]
        %v288 = vld [vmem:[%s280 + $0x20] sm:$0xff]
        %v289 = vld [vmem:[%s280 + $0x28] sm:$0xff]
        %v290 = vld [vmem:[%s280 + $0x30] sm:$0xff]
        %v291 = vld [vmem:[%s280 + $0x38] sm:$0xff]
        %v292 = vld [vmem:[%s280 + $0x40] sm:$0xff]
        %v293 = vld [vmem:[%s280 + $0x48] sm:$0xff]
        %v294 = vld [vmem:[%s280 + $0x50] sm:$0xff]
        %v295 = vld [vmem:[%s280 + $0x58] sm:$0xff]
        %v296 = vld [vmem:[%s280 + $0x60] sm:$0xff]
        %v297 = vld [vmem:[%s280 + $0x68] sm:$0xff]
        %v298 = vld [vmem:[%s280 + $0x70] sm:$0xff]
        %v299 = vld [vmem:[%s280 + $0x78] sm:$0xff]
        %v300 = vld [vmem:[%s280 + $0x80] sm:$0xff]
        %v301 = vld [vmem:[%s280 + $0x88] sm:$0xff]
        %v302 = vld [vmem:[%s280 + $0x90] sm:$0xff]
        %v303 = vld [vmem:[%s280 + $0x98] sm:$0xff]
        %v304 = vld [vmem:[%s280 + $0xa0] sm:$0xff]
        %v305 = vld [vmem:[%s280 + $0xa8] sm:$0xff]
        %v306 = vld [vmem:[%s280 + $0xb0] sm:$0xff]
        %v307 = vld [vmem:[%s280 + $0xb8] sm:$0xff]
        %v308 = vld [vmem:[%s280 + $0xc0] sm:$0xff]
        %v309 = vld [vmem:[%s280 + $0xc8] sm:$0xff]
        %v310 = vld [vmem:[%s280 + $0xd0] sm:$0xff]
        %v311 = vld [vmem:[%s280 + $0xd8] sm:$0xff]
        %v312 = vld [vmem:[%s280 + $0xe0] sm:$0xff]
        %v313 = vld [vmem:[%s280 + $0xe8] sm:$0xff]
        %v314 = vld [vmem:[%s280 + $0xf0] sm:$0xff]
        %v315 = vld [vmem:[%s280 + $0xf8] sm:$0xff]
        %v316 = vld [vmem:[%s280 + $0x100] sm:$0xff]
        %v317 = vld [vmem:[%s280 + $0x108] sm:$0xff]
        %v318 = vld [vmem:[%s280 + $0x110] sm:$0xff]
        %v319 = vld [vmem:[%s280 + $0x118] sm:$0xff]
        %v320 = vld [vmem:[%s280 + $0x120] sm:$0xff]
        %v321 = vld [vmem:[%s280 + $0x128] sm:$0xff]
        %v322 = vld [vmem:[%s280 + $0x130] sm:$0xff]
        %v323 = vld [vmem:[%s280 + $0x138] sm:$0xff]
        %v324 = vld [vmem:[%s280 + $0x140] sm:$0xff]
        %v325 = vld [vmem:[%s280 + $0x148] sm:$0xff]
        %v326 = vld [vmem:[%s280 + $0x150] sm:$0xff]
        %v327 = vld [vmem:[%s280 + $0x158] sm:$0xff]
        %v328 = vld [vmem:[%s280 + $0x160] sm:$0xff]
        %v329 = vld [vmem:[%s280 + $0x168] sm:$0xff]
        %v330 = vld [vmem:[%s280 + $0x170] sm:$0xff]
        %v331 = vld [vmem:[%s280 + $0x178] sm:$0xff]
        %v332 = vld [vmem:[%s280 + $0x180] sm:$0xff]
        %v333 = vld [vmem:[%s280 + $0x188] sm:$0xff]
        %v334 = vld [vmem:[%s280 + $0x190] sm:$0xff]
        %v335 = vld [vmem:[%s280 + $0x198] sm:$0xff]
        %v336 = vld [vmem:[%s280 + $0x1a0] sm:$0xff]
        %v337 = vld [vmem:[%s280 + $0x1a8] sm:$0xff]
        %v338 = vld [vmem:[%s280 + $0x1b0] sm:$0xff]
        %v339 = vld [vmem:[%s280 + $0x1b8] sm:$0xff]
        %v340 = vld [vmem:[%s280 + $0x1c0] sm:$0xff]
        %v341 = vld [vmem:[%s280 + $0x1c8] sm:$0xff]
        %v342 = vld [vmem:[%s280 + $0x1d0] sm:$0xff]
        %v343 = vld [vmem:[%s280 + $0x1d8] sm:$0xff]
        %v344 = vld [vmem:[%s280 + $0x1e0] sm:$0xff]
        %v345 = vld [vmem:[%s280 + $0x1e8] sm:$0xff]
        %v346 = vld [vmem:[%s280 + $0x1f0] sm:$0xff]
        %v347 = vld [vmem:[%s280 + $0x1f8] sm:$0xff]
        %v348 = vld [vmem:[%s280 + $0x200] sm:$0xff]
        %v349 = vld [vmem:[%s280 + $0x208] sm:$0xff]
        %v350 = vld [vmem:[%s280 + $0x210] sm:$0xff]
        %v351 = vld [vmem:[%s280 + $0x218] sm:$0xff]
        %v352 = vld [vmem:[%s280 + $0x220] sm:$0xff]
        %v353 = vld [vmem:[%s280 + $0x228] sm:$0xff]
        %v354 = vld [vmem:[%s280 + $0x230] sm:$0xff]
        %v355 = vld [vmem:[%s280 + $0x238] sm:$0xff]
        %v356 = vld [vmem:[%s280 + $0x240] sm:$0xff]
        %v357 = vld [vmem:[%s280 + $0x248] sm:$0xff]
        %v358 = vld [vmem:[%s280 + $0x250] sm:$0xff]
        %v359 = vld [vmem:[%s280 + $0x258] sm:$0xff]
        %v360 = vld [vmem:[%s280 + $0x260] sm:$0xff]
        %v361 = vld [vmem:[%s280 + $0x268] sm:$0xff]
        %v362 = vld [vmem:[%s280 + $0x270] sm:$0xff]
        %v363 = vld [vmem:[%s280 + $0x278] sm:$0xff]
        %v364 = vld [vmem:[%s280 + $0x280] sm:$0xff]
        %v365 = vld [vmem:[%s280 + $0x288] sm:$0xff]
        %v366 = vld [vmem:[%s280 + $0x290] sm:$0xff]
        %v367 = vld [vmem:[%s280 + $0x298] sm:$0xff]
        %v368 = vld [vmem:[%s280 + $0x2a0] sm:$0xff]
        %v369 = vld [vmem:[%s280 + $0x2a8] sm:$0xff]
        %v370 = vld [vmem:[%s280 + $0x2b0] sm:$0xff]
        %v371 = vld [vmem:[%s280 + $0x2b8] sm:$0xff]
        %v372 = vld [vmem:[%s280 + $0x2c0] sm:$0xff]
        %v373 = vld [vmem:[%s280 + $0x2c8] sm:$0xff]
        %v374 = vld [vmem:[%s280 + $0x2d0] sm:$0xff]
        %v375 = vld [vmem:[%s280 + $0x2d8] sm:$0xff]
        %v376 = vld [vmem:[%s280 + $0x2e0] sm:$0xff]
        %v377 = vld [vmem:[%s280 + $0x2e8] sm:$0xff]
        %v378 = vld [vmem:[%s280 + $0x2f0] sm:$0xff]
        %v379 = vld [vmem:[%s280 + $0x2f8] sm:$0xff]
        %v380 = vld [vmem:[%s280 + $0x300] sm:$0xff]
        %v381 = vld [vmem:[%s280 + $0x308] sm:$0xff]
        %v382 = vld [vmem:[%s280 + $0x310] sm:$0xff]
        %v383 = vld [vmem:[%s280 + $0x318] sm:$0xff]
        %v384 = vld [vmem:[%s280 + $0x320] sm:$0xff]
        %v385 = vld [vmem:[%s280 + $0x328] sm:$0xff]
        %v386 = vld [vmem:[%s280 + $0x330] sm:$0xff]
        %v387 = vld [vmem:[%s280 + $0x338] sm:$0xff]
        %v388 = vld [vmem:[%s280 + $0x340] sm:$0xff]
        %v389 = vld [vmem:[%s280 + $0x348] sm:$0xff]
        %v390 = vld [vmem:[%s280 + $0x350] sm:$0xff]
        %v391 = vld [vmem:[%s280 + $0x358] sm:$0xff]
        %v392 = vld [vmem:[%s280 + $0x360] sm:$0xff]
        %v393 = vld [vmem:[%s280 + $0x368] sm:$0xff]
        %v394 = vld [vmem:[%s280 + $0x370] sm:$0xff]
        %v395 = vld [vmem:[%s280 + $0x378] sm:$0xff]
        %v396 = vpack.c.bf16 %v291, %v284
        %v397 = vpack.c.bf16 %v292, %v285
        %v398 = vpack.c.bf16 %v293, %v286
        %v399 = vpack.c.bf16 %v294, %v287
        %v400 = vpack.c.bf16 %v295, %v288
        %v401 = vpack.c.bf16 %v296, %v289
        %v402 = vpack.c.bf16 %v297, %v290
        %v403 = vpack.c.bf16 %v305, %v298
        %v404 = vpack.c.bf16 %v306, %v299
        %v405 = vpack.c.bf16 %v307, %v300
        %v406 = vpack.c.bf16 %v308, %v301
        %v407 = vpack.c.bf16 %v309, %v302
        %v408 = vpack.c.bf16 %v310, %v303
        %v409 = vpack.c.bf16 %v311, %v304
        %v410 = vpack.c.bf16 %v319, %v312
        %v411 = vpack.c.bf16 %v320, %v313
        %v412 = vpack.c.bf16 %v321, %v314
        %v413 = vpack.c.bf16 %v322, %v315
        %v414 = vpack.c.bf16 %v323, %v316
        %v415 = vpack.c.bf16 %v324, %v317
        %v416 = vpack.c.bf16 %v325, %v318
        %v417 = vpack.c.bf16 %v333, %v326
        %v418 = vpack.c.bf16 %v334, %v327
        %v419 = vpack.c.bf16 %v335, %v328
        %v420 = vpack.c.bf16 %v336, %v329
        %v421 = vpack.c.bf16 %v337, %v330
        %v422 = vpack.c.bf16 %v338, %v331
        %v423 = vpack.c.bf16 %v339, %v332
        %v424 = vpack.c.bf16 %v347, %v340
        %v425 = vpack.c.bf16 %v348, %v341
        %v426 = vpack.c.bf16 %v349, %v342
        %v427 = vpack.c.bf16 %v350, %v343
        %v428 = vpack.c.bf16 %v351, %v344
        %v429 = vpack.c.bf16 %v352, %v345
        %v430 = vpack.c.bf16 %v353, %v346
        %v431 = vpack.c.bf16 %v361, %v354
        %v432 = vpack.c.bf16 %v362, %v355
        %v433 = vpack.c.bf16 %v363, %v356
        %v434 = vpack.c.bf16 %v364, %v357
        %v435 = vpack.c.bf16 %v365, %v358
        %v436 = vpack.c.bf16 %v366, %v359
        %v437 = vpack.c.bf16 %v367, %v360
        %v438 = vpack.c.bf16 %v375, %v368
        %v439 = vpack.c.bf16 %v376, %v369
        %v440 = vpack.c.bf16 %v377, %v370
        %v441 = vpack.c.bf16 %v378, %v371
        %v442 = vpack.c.bf16 %v379, %v372
        %v443 = vpack.c.bf16 %v380, %v373
        %v444 = vpack.c.bf16 %v381, %v374
        %v445 = vpack.c.bf16 %v389, %v382
        %v446 = vpack.c.bf16 %v390, %v383
        %v447 = vpack.c.bf16 %v391, %v384
        %v448 = vpack.c.bf16 %v392, %v385
        %v449 = vpack.c.bf16 %v393, %v386
        %v450 = vpack.c.bf16 %v394, %v387
        %v451 = vpack.c.bf16 %v395, %v388
        %v452 = vld [vmem:[%s1] sm:$0xf]
        %v453 = vld [vmem:[%s1 + $0x4] sm:$0xf]
        %v454 = vld [vmem:[%s1 + $0x8] sm:$0xf]
        %v455 = vld [vmem:[%s1 + $0xc] sm:$0xf]
        %v456 = vld [vmem:[%s1 + $0x10] sm:$0xf]
        %v457 = vld [vmem:[%s1 + $0x14] sm:$0xf]
        %v458 = vld [vmem:[%s1 + $0x18] sm:$0xf]
        %v459 = vld [vmem:[%s1 + $0x1c] sm:$0xf]
        %v460 = vld [vmem:[%s1 + $0x20] sm:$0xf]
        %v461 = vld [vmem:[%s1 + $0x24] sm:$0xf]
        %v462 = vld [vmem:[%s1 + $0x28] sm:$0xf]
        %v463 = vld [vmem:[%s1 + $0x2c] sm:$0xf]
        %v464 = vld [vmem:[%s1 + $0x30] sm:$0xf]
        %v465 = vld [vmem:[%s1 + $0x34] sm:$0xf]
        %v466 = vld [vmem:[%s1 + $0x38] sm:$0xf]
        %v467 = vld [vmem:[%s1 + $0x3c] sm:$0xf]
        %v468 = vld [vmem:[%s1 + $0x40] sm:$0xf]
        %v469 = vld [vmem:[%s1 + $0x44] sm:$0xf]
        %v470 = vld [vmem:[%s1 + $0x48] sm:$0xf]
        %v471 = vld [vmem:[%s1 + $0x4c] sm:$0xf]
        %v472 = vld [vmem:[%s1 + $0x50] sm:$0xf]
        %v473 = vld [vmem:[%s1 + $0x54] sm:$0xf]
        %v474 = vld [vmem:[%s1 + $0x58] sm:$0xf]
        %v475 = vld [vmem:[%s1 + $0x5c] sm:$0xf]
        %v476 = vld [vmem:[%s1 + $0x60] sm:$0xf]
        %v477 = vld [vmem:[%s1 + $0x64] sm:$0xf]
        %v478 = vld [vmem:[%s1 + $0x68] sm:$0xf]
        %v479 = vld [vmem:[%s1 + $0x6c] sm:$0xf]
        %v480 = vld [vmem:[%s1 + $0x70] sm:$0xf]
        %v481 = vld [vmem:[%s1 + $0x74] sm:$0xf]
        %v482 = vld [vmem:[%s1 + $0x78] sm:$0xf]
        %v483 = vld [vmem:[%s1 + $0x7c] sm:$0xf]
        %v484 = vld [vmem:[%s1 + $0x80] sm:$0xf]
        %v485 = vld [vmem:[%s1 + $0x84] sm:$0xf]
        %v486 = vld [vmem:[%s1 + $0x88] sm:$0xf]
        %v487 = vld [vmem:[%s1 + $0x8c] sm:$0xf]
        %v488 = vld [vmem:[%s1 + $0x90] sm:$0xf]
        %v489 = vld [vmem:[%s1 + $0x94] sm:$0xf]
        %v490 = vld [vmem:[%s1 + $0x98] sm:$0xf]
        %v491 = vld [vmem:[%s1 + $0x9c] sm:$0xf]
        %v492 = vld [vmem:[%s1 + $0xa0] sm:$0xf]
        %v493 = vld [vmem:[%s1 + $0xa4] sm:$0xf]
        %v494 = vld [vmem:[%s1 + $0xa8] sm:$0xf]
        %v495 = vld [vmem:[%s1 + $0xac] sm:$0xf]
        %v496 = vld [vmem:[%s1 + $0xb0] sm:$0xf]
        %v497 = vld [vmem:[%s1 + $0xb4] sm:$0xf]
        %v498 = vld [vmem:[%s1 + $0xb8] sm:$0xf]
        %v499 = vld [vmem:[%s1 + $0xbc] sm:$0xf]
        %v500 = vld [vmem:[%s1 + $0xc0] sm:$0xf]
        %v501 = vld [vmem:[%s1 + $0xc4] sm:$0xf]
        %v502 = vld [vmem:[%s1 + $0xc8] sm:$0xf]
        %v503 = vld [vmem:[%s1 + $0xcc] sm:$0xf]
        %v504 = vld [vmem:[%s1 + $0xd0] sm:$0xf]
        %v505 = vld [vmem:[%s1 + $0xd4] sm:$0xf]
        %v506 = vld [vmem:[%s1 + $0xd8] sm:$0xf]
        %v507 = vld [vmem:[%s1 + $0xdc] sm:$0xf]
        %v508 = vld [vmem:[%s1 + $0xe0] sm:$0xf]
        %v509 = vld [vmem:[%s1 + $0xe4] sm:$0xf]
        %v510 = vld [vmem:[%s1 + $0xe8] sm:$0xf]
        %v511 = vld [vmem:[%s1 + $0xec] sm:$0xf]
        %v512 = vld [vmem:[%s1 + $0xf0] sm:$0xf]
        %v513 = vld [vmem:[%s1 + $0xf4] sm:$0xf]
        %v514 = vld [vmem:[%s1 + $0xf8] sm:$0xf]
        %v515 = vld [vmem:[%s1 + $0xfc] sm:$0xf]
        %v516 = vld [vmem:[%s1 + $0x100] sm:$0xf]
        %v517 = vld [vmem:[%s1 + $0x104] sm:$0xf]
        %v518 = vld [vmem:[%s1 + $0x108] sm:$0xf]
        %v519 = vld [vmem:[%s1 + $0x10c] sm:$0xf]
        %v520 = vld [vmem:[%s1 + $0x110] sm:$0xf]
        %v521 = vld [vmem:[%s1 + $0x114] sm:$0xf]
        %v522 = vld [vmem:[%s1 + $0x118] sm:$0xf]
        %v523 = vld [vmem:[%s1 + $0x11c] sm:$0xf]
        %v524 = vld [vmem:[%s1 + $0x120] sm:$0xf]
        %v525 = vld [vmem:[%s1 + $0x124] sm:$0xf]
        %v526 = vld [vmem:[%s1 + $0x128] sm:$0xf]
        %v527 = vld [vmem:[%s1 + $0x12c] sm:$0xf]
        %v528 = vld [vmem:[%s1 + $0x130] sm:$0xf]
        %v529 = vld [vmem:[%s1 + $0x134] sm:$0xf]
        %v530 = vld [vmem:[%s1 + $0x138] sm:$0xf]
        %v531 = vld [vmem:[%s1 + $0x13c] sm:$0xf]
        %v532 = vld [vmem:[%s1 + $0x140] sm:$0xf]
        %v533 = vld [vmem:[%s1 + $0x144] sm:$0xf]
        %v534 = vld [vmem:[%s1 + $0x148] sm:$0xf]
        %v535 = vld [vmem:[%s1 + $0x14c] sm:$0xf]
        %v536 = vld [vmem:[%s1 + $0x150] sm:$0xf]
        %v537 = vld [vmem:[%s1 + $0x154] sm:$0xf]
        %v538 = vld [vmem:[%s1 + $0x158] sm:$0xf]
        %v539 = vld [vmem:[%s1 + $0x15c] sm:$0xf]
        %v540 = vld [vmem:[%s1 + $0x160] sm:$0xf]
        %v541 = vld [vmem:[%s1 + $0x164] sm:$0xf]
        %v542 = vld [vmem:[%s1 + $0x168] sm:$0xf]
        %v543 = vld [vmem:[%s1 + $0x16c] sm:$0xf]
        %v544 = vld [vmem:[%s1 + $0x170] sm:$0xf]
        %v545 = vld [vmem:[%s1 + $0x174] sm:$0xf]
        %v546 = vld [vmem:[%s1 + $0x178] sm:$0xf]
        %v547 = vld [vmem:[%s1 + $0x17c] sm:$0xf]
        %v548 = vld [vmem:[%s1 + $0x180] sm:$0xf]
        %v549 = vld [vmem:[%s1 + $0x184] sm:$0xf]
        %v550 = vld [vmem:[%s2] sm:$0x1]
        %v552 = vperm.slane %v550, 0
        %v652 = vunpack.c.l.b16 %v452
        %v653 = vunpack.c.l.b16 %v453
        %v654 = vunpack.c.l.b16 %v454
        %v655 = vunpack.c.l.b16 %v455
        %v656 = vunpack.c.l.b16 %v456
        %v657 = vunpack.c.l.b16 %v457
        %v658 = vunpack.c.l.b16 %v458
        %v659 = vunpack.c.l.b16 %v459
        %v660 = vunpack.c.l.b16 %v460
        %v661 = vunpack.c.l.b16 %v461
        %v662 = vunpack.c.l.b16 %v462
        %v663 = vunpack.c.l.b16 %v463
        %v664 = vunpack.c.l.b16 %v464
        %v665 = vunpack.c.l.b16 %v465
        %v666 = vunpack.c.l.b16 %v466
        %v667 = vunpack.c.l.b16 %v467
        %v668 = vunpack.c.l.b16 %v468
        %v669 = vunpack.c.l.b16 %v469
        %v670 = vunpack.c.l.b16 %v470
        %v671 = vunpack.c.l.b16 %v471
        %v672 = vunpack.c.l.b16 %v472
        %v673 = vunpack.c.l.b16 %v473
        %v674 = vunpack.c.l.b16 %v474
        %v675 = vunpack.c.l.b16 %v475
        %v676 = vunpack.c.l.b16 %v476
        %v677 = vunpack.c.l.b16 %v477
        %v678 = vunpack.c.l.b16 %v478
        %v679 = vunpack.c.l.b16 %v479
        %v680 = vunpack.c.l.b16 %v480
        %v681 = vunpack.c.l.b16 %v481
        %v682 = vunpack.c.l.b16 %v482
        %v683 = vunpack.c.l.b16 %v483
        %v684 = vunpack.c.l.b16 %v484
        %v685 = vunpack.c.l.b16 %v485
        %v686 = vunpack.c.l.b16 %v486
        %v687 = vunpack.c.l.b16 %v487
        %v688 = vunpack.c.l.b16 %v488
        %v689 = vunpack.c.l.b16 %v489
        %v690 = vunpack.c.l.b16 %v490
        %v691 = vunpack.c.l.b16 %v491
        %v692 = vunpack.c.l.b16 %v492
        %v693 = vunpack.c.l.b16 %v493
        %v694 = vunpack.c.l.b16 %v494
        %v695 = vunpack.c.l.b16 %v495
        %v696 = vunpack.c.l.b16 %v496
        %v697 = vunpack.c.l.b16 %v497
        %v698 = vunpack.c.l.b16 %v498
        %v699 = vunpack.c.l.b16 %v499
        %v700 = vunpack.c.l.b16 %v500
        %v701 = vunpack.c.l.b16 %v501
        %v702 = vunpack.c.l.b16 %v502
        %v703 = vunpack.c.l.b16 %v503
        %v704 = vunpack.c.l.b16 %v504
        %v705 = vunpack.c.l.b16 %v505
        %v706 = vunpack.c.l.b16 %v506
        %v707 = vunpack.c.l.b16 %v507
        %v708 = vunpack.c.l.b16 %v508
        %v709 = vunpack.c.l.b16 %v509
        %v710 = vunpack.c.l.b16 %v510
        %v711 = vunpack.c.l.b16 %v511
        %v712 = vunpack.c.l.b16 %v512
        %v713 = vunpack.c.l.b16 %v513
        %v714 = vunpack.c.l.b16 %v514
        %v715 = vunpack.c.l.b16 %v515
        %v716 = vunpack.c.l.b16 %v516
        %v717 = vunpack.c.l.b16 %v517
        %v718 = vunpack.c.l.b16 %v518
        %v719 = vunpack.c.l.b16 %v519
        %v720 = vunpack.c.l.b16 %v520
        %v721 = vunpack.c.l.b16 %v521
        %v722 = vunpack.c.l.b16 %v522
        %v723 = vunpack.c.l.b16 %v523
        %v724 = vunpack.c.l.b16 %v524
        %v725 = vunpack.c.l.b16 %v525
        %v726 = vunpack.c.l.b16 %v526
        %v727 = vunpack.c.l.b16 %v527
        %v728 = vunpack.c.l.b16 %v528
        %v729 = vunpack.c.l.b16 %v529
        %v730 = vunpack.c.l.b16 %v530
        %v731 = vunpack.c.l.b16 %v531
        %v732 = vunpack.c.l.b16 %v532
        %v733 = vunpack.c.l.b16 %v533
        %v734 = vunpack.c.l.b16 %v534
        %v735 = vunpack.c.l.b16 %v535
        %v736 = vunpack.c.l.b16 %v536
        %v737 = vunpack.c.l.b16 %v537
        %v738 = vunpack.c.l.b16 %v538
        %v739 = vunpack.c.l.b16 %v539
        %v740 = vunpack.c.l.b16 %v540
        %v741 = vunpack.c.l.b16 %v541
        %v742 = vunpack.c.l.b16 %v542
        %v743 = vunpack.c.l.b16 %v543
        %v744 = vunpack.c.l.b16 %v544
        %v745 = vunpack.c.l.b16 %v545
        %v746 = vunpack.c.l.b16 %v546
        %v747 = vunpack.c.l.b16 %v547
        %v748 = vunpack.c.l.b16 %v548
        %v749 = vunpack.c.l.b16 %v549
        %v750 = vpack.c.b16 %v653, %v652
        %v751 = vpack.c.b16 %v655, %v654
        %v752 = vpack.c.b16 %v657, %v656
        %v753 = vpack.c.b16 %v659, %v658
        %v754 = vpack.c.b16 %v661, %v660
        %v755 = vpack.c.b16 %v663, %v662
        %v756 = vpack.c.b16 %v665, %v664
        %v757 = vpack.c.b16 %v667, %v666
        %v758 = vpack.c.b16 %v669, %v668
        %v759 = vpack.c.b16 %v671, %v670
        %v760 = vpack.c.b16 %v673, %v672
        %v761 = vpack.c.b16 %v675, %v674
        %v762 = vpack.c.b16 %v677, %v676
        %v763 = vpack.c.b16 %v679, %v678
        %v764 = vpack.c.b16 %v681, %v680
        %v765 = vpack.c.b16 %v683, %v682
        %v766 = vpack.c.b16 %v685, %v684
        %v767 = vpack.c.b16 %v687, %v686
        %v768 = vpack.c.b16 %v689, %v688
        %v769 = vpack.c.b16 %v691, %v690
        %v770 = vpack.c.b16 %v693, %v692
        %v771 = vpack.c.b16 %v695, %v694
        %v772 = vpack.c.b16 %v697, %v696
        %v773 = vpack.c.b16 %v699, %v698
        %v774 = vpack.c.b16 %v701, %v700
        %v775 = vpack.c.b16 %v703, %v702
        %v776 = vpack.c.b16 %v705, %v704
        %v777 = vpack.c.b16 %v707, %v706
        %v778 = vpack.c.b16 %v709, %v708
        %v779 = vpack.c.b16 %v711, %v710
        %v780 = vpack.c.b16 %v713, %v712
        %v781 = vpack.c.b16 %v715, %v714
        %v782 = vpack.c.b16 %v717, %v716
        %v783 = vpack.c.b16 %v719, %v718
        %v784 = vpack.c.b16 %v721, %v720
        %v785 = vpack.c.b16 %v723, %v722
        %v786 = vpack.c.b16 %v725, %v724
        %v787 = vpack.c.b16 %v727, %v726
        %v788 = vpack.c.b16 %v729, %v728
        %v789 = vpack.c.b16 %v731, %v730
        %v790 = vpack.c.b16 %v733, %v732
        %v791 = vpack.c.b16 %v735, %v734
        %v792 = vpack.c.b16 %v737, %v736
        %v793 = vpack.c.b16 %v739, %v738
        %v794 = vpack.c.b16 %v741, %v740
        %v795 = vpack.c.b16 %v743, %v742
        %v796 = vpack.c.b16 %v745, %v744
        %v797 = vpack.c.b16 %v747, %v746
        %v798 = vpack.c.b16 %v749, %v748
        %vm848 = vcmask 130048
        %v850 = vsel %vm848, %v402, 0
        %v853 = vsel %vm848, %v409, 0
        %v856 = vsel %vm848, %v416, 0
        %v859 = vsel %vm848, %v423, 0
        %v862 = vsel %vm848, %v430, 0
        %v865 = vsel %vm848, %v437, 0
        %v868 = vsel %vm848, %v444, 0
        %v871 = vsel %vm848, %v451, 0
        %873 = vmatpush.bf16.msra.mxu0 %v757
        %874 = vmatpush.bf16.msra.mxu0 %v756
        %875 = vmatpush.bf16.msra.mxu0 %v755
        %876 = vmatpush.bf16.msra.mxu0 %v754
        %877 = vmatpush.bf16.msra.mxu0 %v753
        %878 = vmatpush.bf16.msra.mxu0 %v752
        %879 = vmatpush.bf16.msra.mxu0 %v751
        %880 = vmatpush.bf16.msra.mxu0 %v750
        %881 = vmatmul.bf16.gmra.mxu0 %v396
        %v882 = vpop.f32.mrf.mxu0
        %v883 = vadd.f32 %v552, %v882
        %v884 = vpop.f32.mrf.mxu0
        %v885 = vadd.f32 %v552, %v884
        %886 = vmatmul.bf16.gmra.mxu0 %v403
        %v887 = vpop.f32.mrf.mxu0
        %v888 = vadd.f32 %v552, %v887
        %v889 = vpop.f32.mrf.mxu0
        %v890 = vadd.f32 %v552, %v889
        %891 = vmatmul.bf16.gmra.mxu0 %v410
        %v892 = vpop.f32.mrf.mxu0
        %v893 = vadd.f32 %v552, %v892
        %v894 = vpop.f32.mrf.mxu0
        %v895 = vadd.f32 %v552, %v894
        %896 = vmatmul.bf16.gmra.mxu0 %v417
        %v897 = vpop.f32.mrf.mxu0
        %v898 = vadd.f32 %v552, %v897
        %v899 = vpop.f32.mrf.mxu0
        %v900 = vadd.f32 %v552, %v899
        %901 = vmatmul.bf16.gmra.mxu0 %v424
        %v902 = vpop.f32.mrf.mxu0
        %v903 = vadd.f32 %v552, %v902
        %v904 = vpop.f32.mrf.mxu0
        %v905 = vadd.f32 %v552, %v904
        %906 = vmatmul.bf16.gmra.mxu0 %v431
        %v907 = vpop.f32.mrf.mxu0
        %v908 = vadd.f32 %v552, %v907
        %v909 = vpop.f32.mrf.mxu0
        %v910 = vadd.f32 %v552, %v909
        %911 = vmatmul.bf16.gmra.mxu0 %v438
        %v912 = vpop.f32.mrf.mxu0
        %v913 = vadd.f32 %v552, %v912
        %v914 = vpop.f32.mrf.mxu0
        %v915 = vadd.f32 %v552, %v914
        %916 = vmatmul.bf16.gmra.mxu0 %v445
        %v917 = vpop.f32.mrf.mxu0
        %v918 = vadd.f32 %v552, %v917
        %v919 = vpop.f32.mrf.mxu0
        %v920 = vadd.f32 %v552, %v919
        %921 = vdwg.mxu0
        %922 = vmatpush.bf16.msra.mxu0 %v765
        %923 = vmatpush.bf16.msra.mxu0 %v764
        %924 = vmatpush.bf16.msra.mxu0 %v763
        %925 = vmatpush.bf16.msra.mxu0 %v762
        %926 = vmatpush.bf16.msra.mxu0 %v761
        %927 = vmatpush.bf16.msra.mxu0 %v760
        %928 = vmatpush.bf16.msra.mxu0 %v759
        %929 = vmatpush.bf16.msra.mxu0 %v758
        %930 = vmatmul.bf16.gmra.mxu0 %v397
        %v931 = vpop.f32.mrf.mxu0
        %v932 = vadd.f32 %v883, %v931
        %v933 = vpop.f32.mrf.mxu0
        %v934 = vadd.f32 %v885, %v933
        %935 = vmatmul.bf16.gmra.mxu0 %v404
        %v936 = vpop.f32.mrf.mxu0
        %v937 = vadd.f32 %v888, %v936
        %v938 = vpop.f32.mrf.mxu0
        %v939 = vadd.f32 %v890, %v938
        %940 = vmatmul.bf16.gmra.mxu0 %v411
        %v941 = vpop.f32.mrf.mxu0
        %v942 = vadd.f32 %v893, %v941
        %v943 = vpop.f32.mrf.mxu0
        %v944 = vadd.f32 %v895, %v943
        %945 = vmatmul.bf16.gmra.mxu0 %v418
        %v946 = vpop.f32.mrf.mxu0
        %v947 = vadd.f32 %v898, %v946
        %v948 = vpop.f32.mrf.mxu0
        %v949 = vadd.f32 %v900, %v948
        %950 = vmatmul.bf16.gmra.mxu0 %v425
        %v951 = vpop.f32.mrf.mxu0
        %v952 = vadd.f32 %v903, %v951
        %v953 = vpop.f32.mrf.mxu0
        %v954 = vadd.f32 %v905, %v953
        %955 = vmatmul.bf16.gmra.mxu0 %v432
        %v956 = vpop.f32.mrf.mxu0
        %v957 = vadd.f32 %v908, %v956
        %v958 = vpop.f32.mrf.mxu0
        %v959 = vadd.f32 %v910, %v958
        %960 = vmatmul.bf16.gmra.mxu0 %v439
        %v961 = vpop.f32.mrf.mxu0
        %v962 = vadd.f32 %v913, %v961
        %v963 = vpop.f32.mrf.mxu0
        %v964 = vadd.f32 %v915, %v963
        %965 = vmatmul.bf16.gmra.mxu0 %v446
        %v966 = vpop.f32.mrf.mxu0
        %v967 = vadd.f32 %v918, %v966
        %v968 = vpop.f32.mrf.mxu0
        %v969 = vadd.f32 %v920, %v968
        %970 = vdwg.mxu0
        %971 = vmatpush.bf16.msra.mxu0 %v773
        %972 = vmatpush.bf16.msra.mxu0 %v772
        %973 = vmatpush.bf16.msra.mxu0 %v771
        %974 = vmatpush.bf16.msra.mxu0 %v770
        %975 = vmatpush.bf16.msra.mxu0 %v769
        %976 = vmatpush.bf16.msra.mxu0 %v768
        %977 = vmatpush.bf16.msra.mxu0 %v767
        %978 = vmatpush.bf16.msra.mxu0 %v766
        %979 = vmatmul.bf16.gmra.mxu0 %v398
        %v980 = vpop.f32.mrf.mxu0
        %v981 = vadd.f32 %v932, %v980
        %v982 = vpop.f32.mrf.mxu0
        %v983 = vadd.f32 %v934, %v982
        %984 = vmatmul.bf16.gmra.mxu0 %v405
        %v985 = vpop.f32.mrf.mxu0
        %v986 = vadd.f32 %v937, %v985
        %v987 = vpop.f32.mrf.mxu0
        %v988 = vadd.f32 %v939, %v987
        %989 = vmatmul.bf16.gmra.mxu0 %v412
        %v990 = vpop.f32.mrf.mxu0
        %v991 = vadd.f32 %v942, %v990
        %v992 = vpop.f32.mrf.mxu0
        %v993 = vadd.f32 %v944, %v992
        %994 = vmatmul.bf16.gmra.mxu0 %v419
        %v995 = vpop.f32.mrf.mxu0
        %v996 = vadd.f32 %v947, %v995
        %v997 = vpop.f32.mrf.mxu0
        %v998 = vadd.f32 %v949, %v997
        %999 = vmatmul.bf16.gmra.mxu0 %v426
        %v1000 = vpop.f32.mrf.mxu0
        %v1001 = vadd.f32 %v952, %v1000
        %v1002 = vpop.f32.mrf.mxu0
        %v1003 = vadd.f32 %v954, %v1002
        %1004 = vmatmul.bf16.gmra.mxu0 %v433
        %v1005 = vpop.f32.mrf.mxu0
        %v1006 = vadd.f32 %v957, %v1005
        %v1007 = vpop.f32.mrf.mxu0
        %v1008 = vadd.f32 %v959, %v1007
        %1009 = vmatmul.bf16.gmra.mxu0 %v440
        %v1010 = vpop.f32.mrf.mxu0
        %v1011 = vadd.f32 %v962, %v1010
        %v1012 = vpop.f32.mrf.mxu0
        %v1013 = vadd.f32 %v964, %v1012
        %1014 = vmatmul.bf16.gmra.mxu0 %v447
        %v1015 = vpop.f32.mrf.mxu0
        %v1016 = vadd.f32 %v967, %v1015
        %v1017 = vpop.f32.mrf.mxu0
        %v1018 = vadd.f32 %v969, %v1017
        %1019 = vdwg.mxu0
        %1020 = vmatpush.bf16.msra.mxu0 %v781
        %1021 = vmatpush.bf16.msra.mxu0 %v780
        %1022 = vmatpush.bf16.msra.mxu0 %v779
        %1023 = vmatpush.bf16.msra.mxu0 %v778
        %1024 = vmatpush.bf16.msra.mxu0 %v777
        %1025 = vmatpush.bf16.msra.mxu0 %v776
        %1026 = vmatpush.bf16.msra.mxu0 %v775
        %1027 = vmatpush.bf16.msra.mxu0 %v774
        %1028 = vmatmul.bf16.gmra.mxu0 %v399
        %v1029 = vpop.f32.mrf.mxu0
        %v1030 = vadd.f32 %v981, %v1029
        %v1031 = vpop.f32.mrf.mxu0
        %v1032 = vadd.f32 %v983, %v1031
        %1033 = vmatmul.bf16.gmra.mxu0 %v406
        %v1034 = vpop.f32.mrf.mxu0
        %v1035 = vadd.f32 %v986, %v1034
        %v1036 = vpop.f32.mrf.mxu0
        %v1037 = vadd.f32 %v988, %v1036
        %1038 = vmatmul.bf16.gmra.mxu0 %v413
        %v1039 = vpop.f32.mrf.mxu0
        %v1040 = vadd.f32 %v991, %v1039
        %v1041 = vpop.f32.mrf.mxu0
        %v1042 = vadd.f32 %v993, %v1041
        %1043 = vmatmul.bf16.gmra.mxu0 %v420
        %v1044 = vpop.f32.mrf.mxu0
        %v1045 = vadd.f32 %v996, %v1044
        %v1046 = vpop.f32.mrf.mxu0
        %v1047 = vadd.f32 %v998, %v1046
        %1048 = vmatmul.bf16.gmra.mxu0 %v427
        %v1049 = vpop.f32.mrf.mxu0
        %v1050 = vadd.f32 %v1001, %v1049
        %v1051 = vpop.f32.mrf.mxu0
        %v1052 = vadd.f32 %v1003, %v1051
        %1053 = vmatmul.bf16.gmra.mxu0 %v434
        %v1054 = vpop.f32.mrf.mxu0
        %v1055 = vadd.f32 %v1006, %v1054
        %v1056 = vpop.f32.mrf.mxu0
        %v1057 = vadd.f32 %v1008, %v1056
        %1058 = vmatmul.bf16.gmra.mxu0 %v441
        %v1059 = vpop.f32.mrf.mxu0
        %v1060 = vadd.f32 %v1011, %v1059
        %v1061 = vpop.f32.mrf.mxu0
        %v1062 = vadd.f32 %v1013, %v1061
        %1063 = vmatmul.bf16.gmra.mxu0 %v448
        %v1064 = vpop.f32.mrf.mxu0
        %v1065 = vadd.f32 %v1016, %v1064
        %v1066 = vpop.f32.mrf.mxu0
        %v1067 = vadd.f32 %v1018, %v1066
        %1068 = vdwg.mxu0
        %1069 = vmatpush.bf16.msra.mxu0 %v789
        %1070 = vmatpush.bf16.msra.mxu0 %v788
        %1071 = vmatpush.bf16.msra.mxu0 %v787
        %1072 = vmatpush.bf16.msra.mxu0 %v786
        %1073 = vmatpush.bf16.msra.mxu0 %v785
        %1074 = vmatpush.bf16.msra.mxu0 %v784
        %1075 = vmatpush.bf16.msra.mxu0 %v783
        %1076 = vmatpush.bf16.msra.mxu0 %v782
        %1077 = vmatmul.bf16.gmra.mxu0 %v400
        %v1078 = vpop.f32.mrf.mxu0
        %v1079 = vadd.f32 %v1030, %v1078
        %v1080 = vpop.f32.mrf.mxu0
        %v1081 = vadd.f32 %v1032, %v1080
        %1082 = vmatmul.bf16.gmra.mxu0 %v407
        %v1083 = vpop.f32.mrf.mxu0
        %v1084 = vadd.f32 %v1035, %v1083
        %v1085 = vpop.f32.mrf.mxu0
        %v1086 = vadd.f32 %v1037, %v1085
        %1087 = vmatmul.bf16.gmra.mxu0 %v414
        %v1088 = vpop.f32.mrf.mxu0
        %v1089 = vadd.f32 %v1040, %v1088
        %v1090 = vpop.f32.mrf.mxu0
        %v1091 = vadd.f32 %v1042, %v1090
        %1092 = vmatmul.bf16.gmra.mxu0 %v421
        %v1093 = vpop.f32.mrf.mxu0
        %v1094 = vadd.f32 %v1045, %v1093
        %v1095 = vpop.f32.mrf.mxu0
        %v1096 = vadd.f32 %v1047, %v1095
        %1097 = vmatmul.bf16.gmra.mxu0 %v428
        %v1098 = vpop.f32.mrf.mxu0
        %v1099 = vadd.f32 %v1050, %v1098
        %v1100 = vpop.f32.mrf.mxu0
        %v1101 = vadd.f32 %v1052, %v1100
        %1102 = vmatmul.bf16.gmra.mxu0 %v435
        %v1103 = vpop.f32.mrf.mxu0
        %v1104 = vadd.f32 %v1055, %v1103
        %v1105 = vpop.f32.mrf.mxu0
        %v1106 = vadd.f32 %v1057, %v1105
        %1107 = vmatmul.bf16.gmra.mxu0 %v442
        %v1108 = vpop.f32.mrf.mxu0
        %v1109 = vadd.f32 %v1060, %v1108
        %v1110 = vpop.f32.mrf.mxu0
        %v1111 = vadd.f32 %v1062, %v1110
        %1112 = vmatmul.bf16.gmra.mxu0 %v449
        %v1113 = vpop.f32.mrf.mxu0
        %v1114 = vadd.f32 %v1065, %v1113
        %v1115 = vpop.f32.mrf.mxu0
        %v1116 = vadd.f32 %v1067, %v1115
        %1117 = vdwg.mxu0
        %1118 = vmatpush.bf16.msra.mxu0 %v797
        %1119 = vmatpush.bf16.msra.mxu0 %v796
        %1120 = vmatpush.bf16.msra.mxu0 %v795
        %1121 = vmatpush.bf16.msra.mxu0 %v794
        %1122 = vmatpush.bf16.msra.mxu0 %v793
        %1123 = vmatpush.bf16.msra.mxu0 %v792
        %1124 = vmatpush.bf16.msra.mxu0 %v791
        %1125 = vmatpush.bf16.msra.mxu0 %v790
        %1126 = vmatmul.bf16.gmra.mxu0 %v401
        %v1127 = vpop.f32.mrf.mxu0
        %v1128 = vadd.f32 %v1079, %v1127
        %v1129 = vpop.f32.mrf.mxu0
        %v1130 = vadd.f32 %v1081, %v1129
        %1131 = vmatmul.bf16.gmra.mxu0 %v408
        %v1132 = vpop.f32.mrf.mxu0
        %v1133 = vadd.f32 %v1084, %v1132
        %v1134 = vpop.f32.mrf.mxu0
        %v1135 = vadd.f32 %v1086, %v1134
        %1136 = vmatmul.bf16.gmra.mxu0 %v415
        %v1137 = vpop.f32.mrf.mxu0
        %v1138 = vadd.f32 %v1089, %v1137
        %v1139 = vpop.f32.mrf.mxu0
        %v1140 = vadd.f32 %v1091, %v1139
        %1141 = vmatmul.bf16.gmra.mxu0 %v422
        %v1142 = vpop.f32.mrf.mxu0
        %v1143 = vadd.f32 %v1094, %v1142
        %v1144 = vpop.f32.mrf.mxu0
        %v1145 = vadd.f32 %v1096, %v1144
        %1146 = vmatmul.bf16.gmra.mxu0 %v429
        %v1147 = vpop.f32.mrf.mxu0
        %v1148 = vadd.f32 %v1099, %v1147
        %v1149 = vpop.f32.mrf.mxu0
        %v1150 = vadd.f32 %v1101, %v1149
        %1151 = vmatmul.bf16.gmra.mxu0 %v436
        %v1152 = vpop.f32.mrf.mxu0
        %v1153 = vadd.f32 %v1104, %v1152
        %v1154 = vpop.f32.mrf.mxu0
        %v1155 = vadd.f32 %v1106, %v1154
        %1156 = vmatmul.bf16.gmra.mxu0 %v443
        %v1157 = vpop.f32.mrf.mxu0
        %v1158 = vadd.f32 %v1109, %v1157
        %v1159 = vpop.f32.mrf.mxu0
        %v1160 = vadd.f32 %v1111, %v1159
        %1161 = vmatmul.bf16.gmra.mxu0 %v450
        %v1162 = vpop.f32.mrf.mxu0
        %v1163 = vadd.f32 %v1114, %v1162
        %v1164 = vpop.f32.mrf.mxu0
        %v1165 = vadd.f32 %v1116, %v1164
        %1166 = vdwg.mxu0
        %1167 = vmatpush.bf16.msra.mxu0 0
        %1168 = vmatpush.bf16.msra.mxu0 0
        %1169 = vmatpush.bf16.msra.mxu0 0
        %1170 = vmatpush.bf16.msra.mxu0 0
        %1171 = vmatpush.bf16.msra.mxu0 0
        %1172 = vmatpush.bf16.msra.mxu0 0
        %1173 = vmatpush.bf16.msra.mxu0 0
        %1174 = vmatpush.bf16.msra.mxu0 %v798
        %1175 = vmatmul.bf16.gmra.mxu0 %v850
        %v1176 = vpop.f32.mrf.mxu0
        %v1177 = vadd.f32 %v1128, %v1176
        %v1178 = vpop.f32.mrf.mxu0
        %v1179 = vadd.f32 %v1130, %v1178
        %1180 = vmatmul.bf16.gmra.mxu0 %v853
        %v1181 = vpop.f32.mrf.mxu0
        %v1182 = vadd.f32 %v1133, %v1181
        %v1183 = vpop.f32.mrf.mxu0
        %v1184 = vadd.f32 %v1135, %v1183
        %1185 = vmatmul.bf16.gmra.mxu0 %v856
        %v1186 = vpop.f32.mrf.mxu0
        %v1187 = vadd.f32 %v1138, %v1186
        %v1188 = vpop.f32.mrf.mxu0
        %v1189 = vadd.f32 %v1140, %v1188
        %1190 = vmatmul.bf16.gmra.mxu0 %v859
        %v1191 = vpop.f32.mrf.mxu0
        %v1192 = vadd.f32 %v1143, %v1191
        %v1193 = vpop.f32.mrf.mxu0
        %v1194 = vadd.f32 %v1145, %v1193
        %1195 = vmatmul.bf16.gmra.mxu0 %v862
        %v1196 = vpop.f32.mrf.mxu0
        %v1197 = vadd.f32 %v1148, %v1196
        %v1198 = vpop.f32.mrf.mxu0
        %v1199 = vadd.f32 %v1150, %v1198
        %1200 = vmatmul.bf16.gmra.mxu0 %v865
        %v1201 = vpop.f32.mrf.mxu0
        %v1202 = vadd.f32 %v1153, %v1201
        %v1203 = vpop.f32.mrf.mxu0
        %v1204 = vadd.f32 %v1155, %v1203
        %1205 = vmatmul.bf16.gmra.mxu0 %v868
        %v1206 = vpop.f32.mrf.mxu0
        %v1207 = vadd.f32 %v1158, %v1206
        %v1208 = vpop.f32.mrf.mxu0
        %v1209 = vadd.f32 %v1160, %v1208
        %1210 = vmatmul.bf16.gmra.mxu0 %v871
        %v1211 = vpop.f32.mrf.mxu0
        %v1212 = vadd.f32 %v1163, %v1211
        %v1213 = vpop.f32.mrf.mxu0
        %v1214 = vadd.f32 %v1165, %v1213
        %1215 = vdwg.mxu0
        %v1216 = vmax.f32 %v1177, 0.0
        %v1217 = vmax.f32 %v1179, 0.0
        %v1218 = vmax.f32 %v1182, 0.0
        %v1219 = vmax.f32 %v1184, 0.0
        %v1220 = vmax.f32 %v1187, 0.0
        %v1221 = vmax.f32 %v1189, 0.0
        %v1222 = vmax.f32 %v1192, 0.0
        %v1223 = vmax.f32 %v1194, 0.0
        %v1224 = vmax.f32 %v1197, 0.0
        %v1225 = vmax.f32 %v1199, 0.0
        %v1226 = vmax.f32 %v1202, 0.0
        %v1227 = vmax.f32 %v1204, 0.0
        %v1228 = vmax.f32 %v1207, 0.0
        %v1229 = vmax.f32 %v1209, 0.0
        %v1230 = vmax.f32 %v1212, 0.0
        %v1231 = vmax.f32 %v1214, 0.0
        %v1232 = vpack.c.bf16 %v1217, %v1216
        %v1233 = vpack.c.bf16 %v1219, %v1218
        %v1234 = vpack.c.bf16 %v1221, %v1220
        %v1235 = vpack.c.bf16 %v1223, %v1222
        %v1236 = vpack.c.bf16 %v1225, %v1224
        %v1237 = vpack.c.bf16 %v1227, %v1226
        %v1238 = vpack.c.bf16 %v1229, %v1228
        %v1239 = vpack.c.bf16 %v1231, %v1230
        %v1240 = vld [vmem:[%s3] sm:$0xf]
        %v1241 = vld [vmem:[%s3 + $0x4] sm:$0xf]
        %v1242 = vld [vmem:[%s3 + $0x8] sm:$0xf]
        %v1243 = vld [vmem:[%s3 + $0xc] sm:$0xf]
        %v1244 = vld [vmem:[%s3 + $0x10] sm:$0xf]
        %v1245 = vld [vmem:[%s3 + $0x14] sm:$0xf]
        %v1246 = vld [vmem:[%s3 + $0x18] sm:$0xf]
        %v1247 = vld [vmem:[%s3 + $0x1c] sm:$0xf]
        %v1248 = vld [vmem:[%s3 + $0x20] sm:$0xf]
        %v1249 = vld [vmem:[%s3 + $0x24] sm:$0xf]
        %v1250 = vld [vmem:[%s3 + $0x28] sm:$0xf]
        %v1251 = vld [vmem:[%s3 + $0x2c] sm:$0xf]
        %v1252 = vld [vmem:[%s3 + $0x30] sm:$0xf]
        %v1253 = vld [vmem:[%s3 + $0x34] sm:$0xf]
        %v1254 = vld [vmem:[%s3 + $0x38] sm:$0xf]
        %v1255 = vld [vmem:[%s3 + $0x3c] sm:$0xf]
        %v1256 = vld [vmem:[%s4] sm:$0x1]
        %v1258 = vperm.slane %v1256, 0
        %v1276 = vunpack.c.l.b16 %v1240
        %v1277 = vunpack.c.l.b16 %v1241
        %v1278 = vunpack.c.l.b16 %v1242
        %v1279 = vunpack.c.l.b16 %v1243
        %v1280 = vunpack.c.l.b16 %v1244
        %v1281 = vunpack.c.l.b16 %v1245
        %v1282 = vunpack.c.l.b16 %v1246
        %v1283 = vunpack.c.l.b16 %v1247
        %v1284 = vunpack.c.l.b16 %v1248
        %v1285 = vunpack.c.l.b16 %v1249
        %v1286 = vunpack.c.l.b16 %v1250
        %v1287 = vunpack.c.l.b16 %v1251
        %v1288 = vunpack.c.l.b16 %v1252
        %v1289 = vunpack.c.l.b16 %v1253
        %v1290 = vunpack.c.l.b16 %v1254
        %v1291 = vunpack.c.l.b16 %v1255
        %v1292 = vpack.c.b16 %v1277, %v1276
        %v1293 = vpack.c.b16 %v1279, %v1278
        %v1294 = vpack.c.b16 %v1281, %v1280
        %v1295 = vpack.c.b16 %v1283, %v1282
        %v1296 = vpack.c.b16 %v1285, %v1284
        %v1297 = vpack.c.b16 %v1287, %v1286
        %v1298 = vpack.c.b16 %v1289, %v1288
        %v1299 = vpack.c.b16 %v1291, %v1290
        %1308 = vmatpush.bf16.msra.mxu0 %v1299
        %1309 = vmatpush.bf16.msra.mxu0 %v1298
        %1310 = vmatpush.bf16.msra.mxu0 %v1297
        %1311 = vmatpush.bf16.msra.mxu0 %v1296
        %1312 = vmatpush.bf16.msra.mxu0 %v1295
        %1313 = vmatpush.bf16.msra.mxu0 %v1294
        %1314 = vmatpush.bf16.msra.mxu0 %v1293
        %1315 = vmatpush.bf16.msra.mxu0 %v1292
        %1316 = vmatmul.bf16.gmra.mxu0 %v1232
        %v1317 = vpop.f32.mrf.mxu0
        %v1318 = vadd.f32 %v1258, %v1317
        %v1319 = vpop.f32.mrf.mxu0
        %v1320 = vadd.f32 %v1258, %v1319
        %1321 = vmatmul.bf16.gmra.mxu0 %v1233
        %v1322 = vpop.f32.mrf.mxu0
        %v1323 = vadd.f32 %v1258, %v1322
        %v1324 = vpop.f32.mrf.mxu0
        %v1325 = vadd.f32 %v1258, %v1324
        %1326 = vmatmul.bf16.gmra.mxu0 %v1234
        %v1327 = vpop.f32.mrf.mxu0
        %v1328 = vadd.f32 %v1258, %v1327
        %v1329 = vpop.f32.mrf.mxu0
        %v1330 = vadd.f32 %v1258, %v1329
        %1331 = vmatmul.bf16.gmra.mxu0 %v1235
        %v1332 = vpop.f32.mrf.mxu0
        %v1333 = vadd.f32 %v1258, %v1332
        %v1334 = vpop.f32.mrf.mxu0
        %v1335 = vadd.f32 %v1258, %v1334
        %1336 = vmatmul.bf16.gmra.mxu0 %v1236
        %v1337 = vpop.f32.mrf.mxu0
        %v1338 = vadd.f32 %v1258, %v1337
        %v1339 = vpop.f32.mrf.mxu0
        %v1340 = vadd.f32 %v1258, %v1339
        %1341 = vmatmul.bf16.gmra.mxu0 %v1237
        %v1342 = vpop.f32.mrf.mxu0
        %v1343 = vadd.f32 %v1258, %v1342
        %v1344 = vpop.f32.mrf.mxu0
        %v1345 = vadd.f32 %v1258, %v1344
        %1346 = vmatmul.bf16.gmra.mxu0 %v1238
        %v1347 = vpop.f32.mrf.mxu0
        %v1348 = vadd.f32 %v1258, %v1347
        %v1349 = vpop.f32.mrf.mxu0
        %v1350 = vadd.f32 %v1258, %v1349
        %1351 = vmatmul.bf16.gmra.mxu0 %v1239
        %v1352 = vpop.f32.mrf.mxu0
        %v1353 = vadd.f32 %v1258, %v1352
        %v1354 = vpop.f32.mrf.mxu0
        %v1355 = vadd.f32 %v1258, %v1354
        %1356 = vdwg.mxu0
        %v1357 = vmax.f32 %v1318, 0.0
        %v1358 = vmax.f32 %v1320, 0.0
        %v1359 = vmax.f32 %v1323, 0.0
        %v1360 = vmax.f32 %v1325, 0.0
        %v1361 = vmax.f32 %v1328, 0.0
        %v1362 = vmax.f32 %v1330, 0.0
        %v1363 = vmax.f32 %v1333, 0.0
        %v1364 = vmax.f32 %v1335, 0.0
        %v1365 = vmax.f32 %v1338, 0.0
        %v1366 = vmax.f32 %v1340, 0.0
        %v1367 = vmax.f32 %v1343, 0.0
        %v1368 = vmax.f32 %v1345, 0.0
        %v1369 = vmax.f32 %v1348, 0.0
        %v1370 = vmax.f32 %v1350, 0.0
        %v1371 = vmax.f32 %v1353, 0.0
        %v1372 = vmax.f32 %v1355, 0.0
        %v1373 = vpack.c.bf16 %v1358, %v1357
        %v1374 = vpack.c.bf16 %v1360, %v1359
        %v1375 = vpack.c.bf16 %v1362, %v1361
        %v1376 = vpack.c.bf16 %v1364, %v1363
        %v1377 = vpack.c.bf16 %v1366, %v1365
        %v1378 = vpack.c.bf16 %v1368, %v1367
        %v1379 = vpack.c.bf16 %v1370, %v1369
        %v1380 = vpack.c.bf16 %v1372, %v1371
        %v1381 = vld [vmem:[%s5] sm:$0xf]
        %v1382 = vld [vmem:[%s5 + $0x4] sm:$0xf]
        %v1383 = vld [vmem:[%s5 + $0x8] sm:$0xf]
        %v1384 = vld [vmem:[%s5 + $0xc] sm:$0xf]
        %v1385 = vld [vmem:[%s5 + $0x10] sm:$0xf]
        %v1386 = vld [vmem:[%s5 + $0x14] sm:$0xf]
        %v1387 = vld [vmem:[%s5 + $0x18] sm:$0xf]
        %v1388 = vld [vmem:[%s5 + $0x1c] sm:$0xf]
        %v1389 = vld [vmem:[%s5 + $0x20] sm:$0xf]
        %v1390 = vld [vmem:[%s5 + $0x24] sm:$0xf]
        %v1391 = vld [vmem:[%s5 + $0x28] sm:$0xf]
        %v1392 = vld [vmem:[%s5 + $0x2c] sm:$0xf]
        %v1393 = vld [vmem:[%s5 + $0x30] sm:$0xf]
        %v1394 = vld [vmem:[%s5 + $0x34] sm:$0xf]
        %v1395 = vld [vmem:[%s5 + $0x38] sm:$0xf]
        %v1396 = vld [vmem:[%s5 + $0x3c] sm:$0xf]
        %v1397 = vld [vmem:[%s6] sm:$0x1]
        %v1399 = vperm.slane %v1397, 0
        %v1417 = vunpack.c.l.b16 %v1381
        %v1418 = vunpack.c.l.b16 %v1382
        %v1419 = vunpack.c.l.b16 %v1383
        %v1420 = vunpack.c.l.b16 %v1384
        %v1421 = vunpack.c.l.b16 %v1385
        %v1422 = vunpack.c.l.b16 %v1386
        %v1423 = vunpack.c.l.b16 %v1387
        %v1424 = vunpack.c.l.b16 %v1388
        %v1425 = vunpack.c.l.b16 %v1389
        %v1426 = vunpack.c.l.b16 %v1390
        %v1427 = vunpack.c.l.b16 %v1391
        %v1428 = vunpack.c.l.b16 %v1392
        %v1429 = vunpack.c.l.b16 %v1393
        %v1430 = vunpack.c.l.b16 %v1394
        %v1431 = vunpack.c.l.b16 %v1395
        %v1432 = vunpack.c.l.b16 %v1396
        %v1433 = vpack.c.b16 %v1418, %v1417
        %v1434 = vpack.c.b16 %v1420, %v1419
        %v1435 = vpack.c.b16 %v1422, %v1421
        %v1436 = vpack.c.b16 %v1424, %v1423
        %v1437 = vpack.c.b16 %v1426, %v1425
        %v1438 = vpack.c.b16 %v1428, %v1427
        %v1439 = vpack.c.b16 %v1430, %v1429
        %v1440 = vpack.c.b16 %v1432, %v1431
        %1449 = vmatpush.bf16.msra.mxu0 %v1440
        %1450 = vmatpush.bf16.msra.mxu0 %v1439
        %1451 = vmatpush.bf16.msra.mxu0 %v1438
        %1452 = vmatpush.bf16.msra.mxu0 %v1437
        %1453 = vmatpush.bf16.msra.mxu0 %v1436
        %1454 = vmatpush.bf16.msra.mxu0 %v1435
        %1455 = vmatpush.bf16.msra.mxu0 %v1434
        %1456 = vmatpush.bf16.msra.mxu0 %v1433
        %1457 = vmatmul.bf16.gmra.mxu0 %v1373
        %v1458 = vpop.f32.mrf.mxu0
        %v1459 = vadd.f32 %v1399, %v1458
        %v1460 = vpop.f32.mrf.mxu0
        %v1461 = vadd.f32 %v1399, %v1460
        %1462 = vmatmul.bf16.gmra.mxu0 %v1374
        %v1463 = vpop.f32.mrf.mxu0
        %v1464 = vadd.f32 %v1399, %v1463
        %v1465 = vpop.f32.mrf.mxu0
        %v1466 = vadd.f32 %v1399, %v1465
        %1467 = vmatmul.bf16.gmra.mxu0 %v1375
        %v1468 = vpop.f32.mrf.mxu0
        %v1469 = vadd.f32 %v1399, %v1468
        %v1470 = vpop.f32.mrf.mxu0
        %v1471 = vadd.f32 %v1399, %v1470
        %1472 = vmatmul.bf16.gmra.mxu0 %v1376
        %v1473 = vpop.f32.mrf.mxu0
        %v1474 = vadd.f32 %v1399, %v1473
        %v1475 = vpop.f32.mrf.mxu0
        %v1476 = vadd.f32 %v1399, %v1475
        %1477 = vmatmul.bf16.gmra.mxu0 %v1377
        %v1478 = vpop.f32.mrf.mxu0
        %v1479 = vadd.f32 %v1399, %v1478
        %v1480 = vpop.f32.mrf.mxu0
        %v1481 = vadd.f32 %v1399, %v1480
        %1482 = vmatmul.bf16.gmra.mxu0 %v1378
        %v1483 = vpop.f32.mrf.mxu0
        %v1484 = vadd.f32 %v1399, %v1483
        %v1485 = vpop.f32.mrf.mxu0
        %v1486 = vadd.f32 %v1399, %v1485
        %1487 = vmatmul.bf16.gmra.mxu0 %v1379
        %v1488 = vpop.f32.mrf.mxu0
        %v1489 = vadd.f32 %v1399, %v1488
        %v1490 = vpop.f32.mrf.mxu0
        %v1491 = vadd.f32 %v1399, %v1490
        %1492 = vmatmul.bf16.gmra.mxu0 %v1380
        %v1493 = vpop.f32.mrf.mxu0
        %v1494 = vadd.f32 %v1399, %v1493
        %v1495 = vpop.f32.mrf.mxu0
        %v1496 = vadd.f32 %v1399, %v1495
        %1497 = vdwg.mxu0
        %1498 = vmax.xlane.f32.xlu0 %v1459
        %v1499 = vpop.xlane.xlu0 %1498
        %1500 = vmax.xlane.f32.xlu0 %v1461
        %v1501 = vpop.xlane.xlu0 %1500
        %1502 = vmax.xlane.f32.xlu0 %v1464
        %v1503 = vpop.xlane.xlu0 %1502
        %1504 = vmax.xlane.f32.xlu0 %v1466
        %v1505 = vpop.xlane.xlu0 %1504
        %1506 = vmax.xlane.f32.xlu0 %v1469
        %v1507 = vpop.xlane.xlu0 %1506
        %1508 = vmax.xlane.f32.xlu0 %v1471
        %v1509 = vpop.xlane.xlu0 %1508
        %1510 = vmax.xlane.f32.xlu0 %v1474
        %v1511 = vpop.xlane.xlu0 %1510
        %1512 = vmax.xlane.f32.xlu0 %v1476
        %v1513 = vpop.xlane.xlu0 %1512
        %1514 = vmax.xlane.f32.xlu0 %v1479
        %v1515 = vpop.xlane.xlu0 %1514
        %1516 = vmax.xlane.f32.xlu0 %v1481
        %v1517 = vpop.xlane.xlu0 %1516
        %1518 = vmax.xlane.f32.xlu0 %v1484
        %v1519 = vpop.xlane.xlu0 %1518
        %1520 = vmax.xlane.f32.xlu0 %v1486
        %v1521 = vpop.xlane.xlu0 %1520
        %1522 = vmax.xlane.f32.xlu0 %v1489
        %v1523 = vpop.xlane.xlu0 %1522
        %1524 = vmax.xlane.f32.xlu0 %v1491
        %v1525 = vpop.xlane.xlu0 %1524
        %1526 = vmax.xlane.f32.xlu0 %v1494
        %v1527 = vpop.xlane.xlu0 %1526
        %1528 = vmax.xlane.f32.xlu0 %v1496
        %v1529 = vpop.xlane.xlu0 %1528
        %v1530 = vsub.f32 %v1459, %v1499
        %v1531 = vsub.f32 %v1461, %v1501
        %v1532 = vsub.f32 %v1464, %v1503
        %v1533 = vsub.f32 %v1466, %v1505
        %v1534 = vsub.f32 %v1469, %v1507
        %v1535 = vsub.f32 %v1471, %v1509
        %v1536 = vsub.f32 %v1474, %v1511
        %v1537 = vsub.f32 %v1476, %v1513
        %v1538 = vsub.f32 %v1479, %v1515
        %v1539 = vsub.f32 %v1481, %v1517
        %v1540 = vsub.f32 %v1484, %v1519
        %v1541 = vsub.f32 %v1486, %v1521
        %v1542 = vsub.f32 %v1489, %v1523
        %v1543 = vsub.f32 %v1491, %v1525
        %v1544 = vsub.f32 %v1494, %v1527
        %v1545 = vsub.f32 %v1496, %v1529
        %v1546 = vmul.f32 %v1530, 1.442695
        %v1547 = vpow.pop %v1546
        %v1548 = vmul.f32 %v1531, 1.442695
        %v1549 = vpow.pop %v1548
        %v1550 = vmul.f32 %v1532, 1.442695
        %v1551 = vpow.pop %v1550
        %v1552 = vmul.f32 %v1533, 1.442695
        %v1553 = vpow.pop %v1552
        %v1554 = vmul.f32 %v1534, 1.442695
        %v1555 = vpow.pop %v1554
        %v1556 = vmul.f32 %v1535, 1.442695
        %v1557 = vpow.pop %v1556
        %v1558 = vmul.f32 %v1536, 1.442695
        %v1559 = vpow.pop %v1558
        %v1560 = vmul.f32 %v1537, 1.442695
        %v1561 = vpow.pop %v1560
        %v1562 = vmul.f32 %v1538, 1.442695
        %v1563 = vpow.pop %v1562
        %v1564 = vmul.f32 %v1539, 1.442695
        %v1565 = vpow.pop %v1564
        %v1566 = vmul.f32 %v1540, 1.442695
        %v1567 = vpow.pop %v1566
        %v1568 = vmul.f32 %v1541, 1.442695
        %v1569 = vpow.pop %v1568
        %v1570 = vmul.f32 %v1542, 1.442695
        %v1571 = vpow.pop %v1570
        %v1572 = vmul.f32 %v1543, 1.442695
        %v1573 = vpow.pop %v1572
        %v1574 = vmul.f32 %v1544, 1.442695
        %v1575 = vpow.pop %v1574
        %v1576 = vmul.f32 %v1545, 1.442695
        %v1577 = vpow.pop %v1576
        %1578 = vadd.xlane.f32.xlu0 %v1547
        %v1579 = vpop.xlane.xlu0 %1578
        %1580 = vadd.xlane.f32.xlu0 %v1549
        %v1581 = vpop.xlane.xlu0 %1580
        %1582 = vadd.xlane.f32.xlu0 %v1551
        %v1583 = vpop.xlane.xlu0 %1582
        %1584 = vadd.xlane.f32.xlu0 %v1553
        %v1585 = vpop.xlane.xlu0 %1584
        %1586 = vadd.xlane.f32.xlu0 %v1555
        %v1587 = vpop.xlane.xlu0 %1586
        %1588 = vadd.xlane.f32.xlu0 %v1557
        %v1589 = vpop.xlane.xlu0 %1588
        %1590 = vadd.xlane.f32.xlu0 %v1559
        %v1591 = vpop.xlane.xlu0 %1590
        %1592 = vadd.xlane.f32.xlu0 %v1561
        %v1593 = vpop.xlane.xlu0 %1592
        %1594 = vadd.xlane.f32.xlu0 %v1563
        %v1595 = vpop.xlane.xlu0 %1594
        %1596 = vadd.xlane.f32.xlu0 %v1565
        %v1597 = vpop.xlane.xlu0 %1596
        %1598 = vadd.xlane.f32.xlu0 %v1567
        %v1599 = vpop.xlane.xlu0 %1598
        %1600 = vadd.xlane.f32.xlu0 %v1569
        %v1601 = vpop.xlane.xlu0 %1600
        %1602 = vadd.xlane.f32.xlu0 %v1571
        %v1603 = vpop.xlane.xlu0 %1602
        %1604 = vadd.xlane.f32.xlu0 %v1573
        %v1605 = vpop.xlane.xlu0 %1604
        %1606 = vadd.xlane.f32.xlu0 %v1575
        %v1607 = vpop.xlane.xlu0 %1606
        %1608 = vadd.xlane.f32.xlu0 %v1577
        %v1609 = vpop.xlane.xlu0 %1608
        %v1610 = vrcp.pop %v1579
        %v1611 = vmul.f32 %v1579, %v1610
        %v1612 = vsub.f32 1.0, %v1611
        %v1613 = vmul.f32 %v1610, %v1612
        %v1614 = vadd.f32 %v1610, %v1613
        %vm1615 = vweird.f32 %v1579
        %vm1616 = vweird.f32 %v1610
        %vm1617 = vmor %vm1615, %vm1616
        %v1618 = vsel %vm1617, %v1610, %v1614
        %v1619 = vand.u32 2147483647, %v1579
        %vm1620 = vcmp.eq.f32.partialorder %v1619, 8.507059e+37
        %v1621 = vand.u32 %v1579, 2147483648
        %v1622 = vor.u32 1.1754944e-38, %v1621
        %v1623 = vsel %vm1620, %v1622, %v1618
        %v1624 = vmul.f32 %v1547, %v1623
        %v1625 = vrcp.pop %v1581
        %v1626 = vmul.f32 %v1581, %v1625
        %v1627 = vsub.f32 1.0, %v1626
        %v1628 = vmul.f32 %v1625, %v1627
        %v1629 = vadd.f32 %v1625, %v1628
        %vm1630 = vweird.f32 %v1581
        %vm1631 = vweird.f32 %v1625
        %vm1632 = vmor %vm1630, %vm1631
        %v1633 = vsel %vm1632, %v1625, %v1629
        %v1634 = vand.u32 2147483647, %v1581
        %vm1635 = vcmp.eq.f32.partialorder %v1634, 8.507059e+37
        %v1636 = vand.u32 %v1581, 2147483648
        %v1637 = vor.u32 1.1754944e-38, %v1636
        %v1638 = vsel %vm1635, %v1637, %v1633
        %v1639 = vmul.f32 %v1549, %v1638
        %v1640 = vrcp.pop %v1583
        %v1641 = vmul.f32 %v1583, %v1640
        %v1642 = vsub.f32 1.0, %v1641
        %v1643 = vmul.f32 %v1640, %v1642
        %v1644 = vadd.f32 %v1640, %v1643
        %vm1645 = vweird.f32 %v1583
        %vm1646 = vweird.f32 %v1640
        %vm1647 = vmor %vm1645, %vm1646
        %v1648 = vsel %vm1647, %v1640, %v1644
        %v1649 = vand.u32 2147483647, %v1583
        %vm1650 = vcmp.eq.f32.partialorder %v1649, 8.507059e+37
        %v1651 = vand.u32 %v1583, 2147483648
        %v1652 = vor.u32 1.1754944e-38, %v1651
        %v1653 = vsel %vm1650, %v1652, %v1648
        %v1654 = vmul.f32 %v1551, %v1653
        %v1655 = vrcp.pop %v1585
        %v1656 = vmul.f32 %v1585, %v1655
        %v1657 = vsub.f32 1.0, %v1656
        %v1658 = vmul.f32 %v1655, %v1657
        %v1659 = vadd.f32 %v1655, %v1658
        %vm1660 = vweird.f32 %v1585
        %vm1661 = vweird.f32 %v1655
        %vm1662 = vmor %vm1660, %vm1661
        %v1663 = vsel %vm1662, %v1655, %v1659
        %v1664 = vand.u32 2147483647, %v1585
        %vm1665 = vcmp.eq.f32.partialorder %v1664, 8.507059e+37
        %v1666 = vand.u32 %v1585, 2147483648
        %v1667 = vor.u32 1.1754944e-38, %v1666
        %v1668 = vsel %vm1665, %v1667, %v1663
        %v1669 = vmul.f32 %v1553, %v1668
        %v1670 = vrcp.pop %v1587
        %v1671 = vmul.f32 %v1587, %v1670
        %v1672 = vsub.f32 1.0, %v1671
        %v1673 = vmul.f32 %v1670, %v1672
        %v1674 = vadd.f32 %v1670, %v1673
        %vm1675 = vweird.f32 %v1587
        %vm1676 = vweird.f32 %v1670
        %vm1677 = vmor %vm1675, %vm1676
        %v1678 = vsel %vm1677, %v1670, %v1674
        %v1679 = vand.u32 2147483647, %v1587
        %vm1680 = vcmp.eq.f32.partialorder %v1679, 8.507059e+37
        %v1681 = vand.u32 %v1587, 2147483648
        %v1682 = vor.u32 1.1754944e-38, %v1681
        %v1683 = vsel %vm1680, %v1682, %v1678
        %v1684 = vmul.f32 %v1555, %v1683
        %v1685 = vrcp.pop %v1589
        %v1686 = vmul.f32 %v1589, %v1685
        %v1687 = vsub.f32 1.0, %v1686
        %v1688 = vmul.f32 %v1685, %v1687
        %v1689 = vadd.f32 %v1685, %v1688
        %vm1690 = vweird.f32 %v1589
        %vm1691 = vweird.f32 %v1685
        %vm1692 = vmor %vm1690, %vm1691
        %v1693 = vsel %vm1692, %v1685, %v1689
        %v1694 = vand.u32 2147483647, %v1589
        %vm1695 = vcmp.eq.f32.partialorder %v1694, 8.507059e+37
        %v1696 = vand.u32 %v1589, 2147483648
        %v1697 = vor.u32 1.1754944e-38, %v1696
        %v1698 = vsel %vm1695, %v1697, %v1693
        %v1699 = vmul.f32 %v1557, %v1698
        %v1700 = vrcp.pop %v1591
        %v1701 = vmul.f32 %v1591, %v1700
        %v1702 = vsub.f32 1.0, %v1701
        %v1703 = vmul.f32 %v1700, %v1702
        %v1704 = vadd.f32 %v1700, %v1703
        %vm1705 = vweird.f32 %v1591
        %vm1706 = vweird.f32 %v1700
        %vm1707 = vmor %vm1705, %vm1706
        %v1708 = vsel %vm1707, %v1700, %v1704
        %v1709 = vand.u32 2147483647, %v1591
        %vm1710 = vcmp.eq.f32.partialorder %v1709, 8.507059e+37
        %v1711 = vand.u32 %v1591, 2147483648
        %v1712 = vor.u32 1.1754944e-38, %v1711
        %v1713 = vsel %vm1710, %v1712, %v1708
        %v1714 = vmul.f32 %v1559, %v1713
        %v1715 = vrcp.pop %v1593
        %v1716 = vmul.f32 %v1593, %v1715
        %v1717 = vsub.f32 1.0, %v1716
        %v1718 = vmul.f32 %v1715, %v1717
        %v1719 = vadd.f32 %v1715, %v1718
        %vm1720 = vweird.f32 %v1593
        %vm1721 = vweird.f32 %v1715
        %vm1722 = vmor %vm1720, %vm1721
        %v1723 = vsel %vm1722, %v1715, %v1719
        %v1724 = vand.u32 2147483647, %v1593
        %vm1725 = vcmp.eq.f32.partialorder %v1724, 8.507059e+37
        %v1726 = vand.u32 %v1593, 2147483648
        %v1727 = vor.u32 1.1754944e-38, %v1726
        %v1728 = vsel %vm1725, %v1727, %v1723
        %v1729 = vmul.f32 %v1561, %v1728
        %v1730 = vrcp.pop %v1595
        %v1731 = vmul.f32 %v1595, %v1730
        %v1732 = vsub.f32 1.0, %v1731
        %v1733 = vmul.f32 %v1730, %v1732
        %v1734 = vadd.f32 %v1730, %v1733
        %vm1735 = vweird.f32 %v1595
        %vm1736 = vweird.f32 %v1730
        %vm1737 = vmor %vm1735, %vm1736
        %v1738 = vsel %vm1737, %v1730, %v1734
        %v1739 = vand.u32 2147483647, %v1595
        %vm1740 = vcmp.eq.f32.partialorder %v1739, 8.507059e+37
        %v1741 = vand.u32 %v1595, 2147483648
        %v1742 = vor.u32 1.1754944e-38, %v1741
        %v1743 = vsel %vm1740, %v1742, %v1738
        %v1744 = vmul.f32 %v1563, %v1743
        %v1745 = vrcp.pop %v1597
        %v1746 = vmul.f32 %v1597, %v1745
        %v1747 = vsub.f32 1.0, %v1746
        %v1748 = vmul.f32 %v1745, %v1747
        %v1749 = vadd.f32 %v1745, %v1748
        %vm1750 = vweird.f32 %v1597
        %vm1751 = vweird.f32 %v1745
        %vm1752 = vmor %vm1750, %vm1751
        %v1753 = vsel %vm1752, %v1745, %v1749
        %v1754 = vand.u32 2147483647, %v1597
        %vm1755 = vcmp.eq.f32.partialorder %v1754, 8.507059e+37
        %v1756 = vand.u32 %v1597, 2147483648
        %v1757 = vor.u32 1.1754944e-38, %v1756
        %v1758 = vsel %vm1755, %v1757, %v1753
        %v1759 = vmul.f32 %v1565, %v1758
        %v1760 = vrcp.pop %v1599
        %v1761 = vmul.f32 %v1599, %v1760
        %v1762 = vsub.f32 1.0, %v1761
        %v1763 = vmul.f32 %v1760, %v1762
        %v1764 = vadd.f32 %v1760, %v1763
        %vm1765 = vweird.f32 %v1599
        %vm1766 = vweird.f32 %v1760
        %vm1767 = vmor %vm1765, %vm1766
        %v1768 = vsel %vm1767, %v1760, %v1764
        %v1769 = vand.u32 2147483647, %v1599
        %vm1770 = vcmp.eq.f32.partialorder %v1769, 8.507059e+37
        %v1771 = vand.u32 %v1599, 2147483648
        %v1772 = vor.u32 1.1754944e-38, %v1771
        %v1773 = vsel %vm1770, %v1772, %v1768
        %v1774 = vmul.f32 %v1567, %v1773
        %v1775 = vrcp.pop %v1601
        %v1776 = vmul.f32 %v1601, %v1775
        %v1777 = vsub.f32 1.0, %v1776
        %v1778 = vmul.f32 %v1775, %v1777
        %v1779 = vadd.f32 %v1775, %v1778
        %vm1780 = vweird.f32 %v1601
        %vm1781 = vweird.f32 %v1775
        %vm1782 = vmor %vm1780, %vm1781
        %v1783 = vsel %vm1782, %v1775, %v1779
        %v1784 = vand.u32 2147483647, %v1601
        %vm1785 = vcmp.eq.f32.partialorder %v1784, 8.507059e+37
        %v1786 = vand.u32 %v1601, 2147483648
        %v1787 = vor.u32 1.1754944e-38, %v1786
        %v1788 = vsel %vm1785, %v1787, %v1783
        %v1789 = vmul.f32 %v1569, %v1788
        %v1790 = vrcp.pop %v1603
        %v1791 = vmul.f32 %v1603, %v1790
        %v1792 = vsub.f32 1.0, %v1791
        %v1793 = vmul.f32 %v1790, %v1792
        %v1794 = vadd.f32 %v1790, %v1793
        %vm1795 = vweird.f32 %v1603
        %vm1796 = vweird.f32 %v1790
        %vm1797 = vmor %vm1795, %vm1796
        %v1798 = vsel %vm1797, %v1790, %v1794
        %v1799 = vand.u32 2147483647, %v1603
        %vm1800 = vcmp.eq.f32.partialorder %v1799, 8.507059e+37
        %v1801 = vand.u32 %v1603, 2147483648
        %v1802 = vor.u32 1.1754944e-38, %v1801
        %v1803 = vsel %vm1800, %v1802, %v1798
        %v1804 = vmul.f32 %v1571, %v1803
        %v1805 = vrcp.pop %v1605
        %v1806 = vmul.f32 %v1605, %v1805
        %v1807 = vsub.f32 1.0, %v1806
        %v1808 = vmul.f32 %v1805, %v1807
        %v1809 = vadd.f32 %v1805, %v1808
        %vm1810 = vweird.f32 %v1605
        %vm1811 = vweird.f32 %v1805
        %vm1812 = vmor %vm1810, %vm1811
        %v1813 = vsel %vm1812, %v1805, %v1809
        %v1814 = vand.u32 2147483647, %v1605
        %vm1815 = vcmp.eq.f32.partialorder %v1814, 8.507059e+37
        %v1816 = vand.u32 %v1605, 2147483648
        %v1817 = vor.u32 1.1754944e-38, %v1816
        %v1818 = vsel %vm1815, %v1817, %v1813
        %v1819 = vmul.f32 %v1573, %v1818
        %v1820 = vrcp.pop %v1607
        %v1821 = vmul.f32 %v1607, %v1820
        %v1822 = vsub.f32 1.0, %v1821
        %v1823 = vmul.f32 %v1820, %v1822
        %v1824 = vadd.f32 %v1820, %v1823
        %vm1825 = vweird.f32 %v1607
        %vm1826 = vweird.f32 %v1820
        %vm1827 = vmor %vm1825, %vm1826
        %v1828 = vsel %vm1827, %v1820, %v1824
        %v1829 = vand.u32 2147483647, %v1607
        %vm1830 = vcmp.eq.f32.partialorder %v1829, 8.507059e+37
        %v1831 = vand.u32 %v1607, 2147483648
        %v1832 = vor.u32 1.1754944e-38, %v1831
        %v1833 = vsel %vm1830, %v1832, %v1828
        %v1834 = vmul.f32 %v1575, %v1833
        %v1835 = vrcp.pop %v1609
        %v1836 = vmul.f32 %v1609, %v1835
        %v1837 = vsub.f32 1.0, %v1836
        %v1838 = vmul.f32 %v1835, %v1837
        %v1839 = vadd.f32 %v1835, %v1838
        %vm1840 = vweird.f32 %v1609
        %vm1841 = vweird.f32 %v1835
        %vm1842 = vmor %vm1840, %vm1841
        %v1843 = vsel %vm1842, %v1835, %v1839
        %v1844 = vand.u32 2147483647, %v1609
        %vm1845 = vcmp.eq.f32.partialorder %v1844, 8.507059e+37
        %v1846 = vand.u32 %v1609, 2147483648
        %v1847 = vor.u32 1.1754944e-38, %v1846
        %v1848 = vsel %vm1845, %v1847, %v1843
        %v1849 = vmul.f32 %v1577, %v1848
        %v1850 = vpack.c.bf16 %v1624, %v1624
        %v1851 = vpack.c.bf16 %v1639, %v1639
        %v1852 = vpack.c.bf16 %v1654, %v1654
        %v1853 = vpack.c.bf16 %v1669, %v1669
        %v1854 = vpack.c.bf16 %v1684, %v1684
        %v1855 = vpack.c.bf16 %v1699, %v1699
        %v1856 = vpack.c.bf16 %v1714, %v1714
        %v1857 = vpack.c.bf16 %v1729, %v1729
        %v1858 = vpack.c.bf16 %v1744, %v1744
        %v1859 = vpack.c.bf16 %v1759, %v1759
        %v1860 = vpack.c.bf16 %v1774, %v1774
        %v1861 = vpack.c.bf16 %v1789, %v1789
        %v1862 = vpack.c.bf16 %v1804, %v1804
        %v1863 = vpack.c.bf16 %v1819, %v1819
        %v1864 = vpack.c.bf16 %v1834, %v1834
        %v1865 = vpack.c.bf16 %v1849, %v1849
        %1866 = vst [vmem:[%s274] sm:$0xf] %v1850
        %1867 = vst [vmem:[%s274 + $0x4] sm:$0xf] %v1851
        %1868 = vst [vmem:[%s274 + $0x8] sm:$0xf] %v1852
        %1869 = vst [vmem:[%s274 + $0xc] sm:$0xf] %v1853
        %1870 = vst [vmem:[%s274 + $0x10] sm:$0xf] %v1854
        %1871 = vst [vmem:[%s274 + $0x14] sm:$0xf] %v1855
        %1872 = vst [vmem:[%s274 + $0x18] sm:$0xf] %v1856
        %1873 = vst [vmem:[%s274 + $0x1c] sm:$0xf] %v1857
        %1874 = vst [vmem:[%s274 + $0x20] sm:$0xf] %v1858
        %1875 = vst [vmem:[%s274 + $0x24] sm:$0xf] %v1859
        %1876 = vst [vmem:[%s274 + $0x28] sm:$0xf] %v1860
        %1877 = vst [vmem:[%s274 + $0x2c] sm:$0xf] %v1861
        %1878 = vst [vmem:[%s274 + $0x30] sm:$0xf] %v1862
        %1879 = vst [vmem:[%s274 + $0x34] sm:$0xf] %v1863
        %1880 = vst [vmem:[%s274 + $0x38] sm:$0xf] %v1864
        %1881 = vst [vmem:[%s274 + $0x3c] sm:$0xf] %v1865
        %s1882 = sand.u32 %s181, 1
        %s1883 = scalar_lea.sflag [#allocation3], %s1882
        %s1884 = sand.u32 %s181, 1
        %s1885 = smul.addr %s1884, 64
        %s1886 = scalar_lea.vmem [#allocation2], %s1885
        // Predicated region
        $region49: #{tpu_custom_call.1} parent=47 // pred_check
          %p1887 = pneg %p191
        $region50: #{tpu_custom_call.1} parent=47 // pred_check_branch
          %1889 = sbr.rel (%p1887) target = $region52
        $region51: #{tpu_custom_call.1} parent=47 // pred_region
          %s1890 = smul.u32 16, %s21
          %1892 = vsyncadd %s1883, 0
          %s1893 = smul.addr %s1890, 4
          %s1894 = scalar_lea.hbm %s7, %s1893
          %s1895 = sshll.u32 %s1886, 4
          %s1896 = int_to_ptr.vmem [resolvable:$true] %s1895
          %s1897 = sshll.u32 %s1894, 4
          %s1898 = int_to_ptr.hbm [resolvable:$true] %s1897
          %1903 = dma.vmem_to_hbm [thread:$0]  %s1896, 1024, %s1898, %s1883, 64, 64, 4
        $region52: #{tpu_custom_call.1} parent=47 // pred_fallthru
          _
      $region48: #{tpu_custom_call.1} parent=5 // pred_fallthru
        _
      %p1904 = scmp.le.s32.totalorder 2, %s16
      // Predicated region
      $region53: #{tpu_custom_call.1} parent=5 // pred_check
        %p1905 = pneg %p1904
      $region54: #{tpu_custom_call.1} parent=5 // pred_check_branch
        %1907 = sbr.rel (%p1905) target = $region56
      $region55: #{tpu_custom_call.1} parent=5 // pred_region
        %s1908 = ssub.s32 %s16, 2
        // Predicated region
        $region57: #{tpu_custom_call.1} parent=55 // pred_check
          %p1909 = pneg %p197
        $region58: #{tpu_custom_call.1} parent=55 // pred_check_branch
          %1911 = sbr.rel (%p1909) target = $region60
        $region59: #{tpu_custom_call.1} parent=55 // pred_region
          %s1912 = sand.u32 %s182, 1
          %s1913 = scalar_lea.sflag [#allocation3], %s1912
          %s1914 = sand.u32 %s182, 1
          %s1915 = smul.addr %s1914, 64
          %s1916 = scalar_lea.vmem [#allocation2], %s1915
          %1918 = dma.done %s1913, 1024
        $region60: #{tpu_custom_call.1} parent=55 // pred_fallthru
          _
      $region56: #{tpu_custom_call.1} parent=5 // pred_fallthru
        _
    $region6: #{tpu_custom_call.1} parent=1 // loop_footer
      %s20 = sadd.s32 1, %s16
    $region7: #{tpu_custom_call.1} parent=1 // loop_footer_branch
      %15 = sbr.rel target = $region3
    $region8: #{tpu_custom_call.1} parent=1 // loop_exit
      _
    %1919 = vsyncpa [#allocation3], 1
    %s1920 = scalar_lea.sflag [#allocation3], 1
    %1921 = vsyncpa %s1920, 1

</llo_original>
